<compile_context>
chip_gen: v5e
topology: v5e:2x2
jax: 0.10.0
libtpu: 0.0.40
codegen_flags: <defaults>
</compile_context>

<pallas_src>
import numpy as np
import jax
import jax.numpy as jnp
from jax import lax
from jax.experimental import pallas as pl
from jax.experimental.pallas import tpu as pltpu

N_DIGITS = 13
N_CLASSES = 10
C_PAD = 128                 # classes padded to a full lane tile
H_PAD = 128                 # hidden padded to a full lane tile (MXU utilization)
TK = 512                    # feat_dim (K) tile for the pipelined first matmul
NEG = -1e9                  # finite "-inf" so masked math stays NaN-free


def _round_up(x, m):
    return ((x + m - 1) // m) * m


# ----------------------------------------------------------------------------
# Kernel 1: MDCNN head (K-tiled) + cosine-similarity matrix + log-softmax
# ----------------------------------------------------------------------------
def _forward_kernel(x_ref, w1_ref, b1_ref, w2_ref, b2_ref,
                    sim_ref, logp_ref, h_acc):
    k = pl.program_id(0)

    @pl.when(k == 0)
    def _():
        h_acc[...] = jnp.zeros_like(h_acc)

    # bf16 MXU feed, f32 accumulation across K tiles (BlockSpec double-buffers
    # the x / w1 tiles, so the HBM->VMEM DMA overlaps this matmul).
    h_acc[...] += jnp.dot(x_ref[...], w1_ref[...],
                          preferred_element_type=jnp.float32)

    @pl.when(k == pl.num_programs(0) - 1)
    def _():
        n_pad = h_acc.shape[0]
        h = jnp.maximum(h_acc[...] + b1_ref[...], 0.0)            # (n_pad, 128)
        h16 = jnp.broadcast_to(h.astype(jnp.bfloat16)[None],
                               (N_DIGITS, n_pad, H_PAD))
        # (13, n_pad, 128) logits; padded hidden rows / class columns are zero.
        logits = jnp.einsum('dnk,dkc->dnc', h16, w2_ref[...],
                            preferred_element_type=jnp.float32) + b2_ref[...]

        # Cosine-similarity matrix over per-frame flattened logits (zero pad
        # columns contribute nothing to norms or dot products).
        sq = jnp.sum(logits * logits, axis=2, keepdims=True)      # (13,n_pad,1)
        sq = jnp.sum(sq, axis=0, keepdims=True)                   # (1, n_pad,1)
        xn = (logits * lax.rsqrt(jnp.maximum(sq, 1e-12))).astype(jnp.bfloat16)
        gram = jnp.einsum('dnc,dmc->dnm', xn, xn,
                          preferred_element_type=jnp.float32)     # (13,n,n)
        sim_ref[...] = jnp.sum(gram, axis=0)

        # Per-digit log-softmax, vectorized across all 13 digits in one pass.
        col = lax.broadcasted_iota(jnp.int32, (N_DIGITS, n_pad, C_PAD), 2)
        lg = jnp.where(col < N_CLASSES, logits, NEG)              # pad -> NEG
        mx = jnp.max(lg, axis=2, keepdims=True)
        lse = mx + jnp.log(jnp.sum(jnp.exp(lg - mx), axis=2, keepdims=True))
        logp_ref[...] = lg - lse                                  # f32, digit-major


@jax.jit
def fused_forward(x_pad, w1p, b1p, w2p, b2p):
    n_pad, k_pad = x_pad.shape
    nk = k_pad // TK
    cost = pl.CostEstimate(
        flops=int(2 * n_pad * k_pad * H_PAD
                  + 2 * N_DIGITS * n_pad * H_PAD * C_PAD
                  + 2 * N_DIGITS * n_pad * n_pad * C_PAD),
        transcendentals=int(2 * N_DIGITS * n_pad * C_PAD),
        bytes_accessed=int(x_pad.size * 2 + w1p.size * 2 + w2p.size * 2
                           + (b1p.size + b2p.size) * 4
                           + n_pad * n_pad * 4
                           + N_DIGITS * n_pad * C_PAD * 4),
    )
    return pl.pallas_call(
        _forward_kernel,
        out_shape=(
            jax.ShapeDtypeStruct((n_pad, n_pad), jnp.float32),             # sim
            jax.ShapeDtypeStruct((N_DIGITS, n_pad, C_PAD), jnp.float32),   # logp
        ),
        grid_spec=pltpu.PrefetchScalarGridSpec(
            num_scalar_prefetch=0,
            grid=(nk,),
            in_specs=[
                pl.BlockSpec((n_pad, TK), lambda k: (0, k)),               # x
                pl.BlockSpec((TK, H_PAD), lambda k: (k, 0)),               # w1
                pl.BlockSpec((1, H_PAD), lambda k: (0, 0)),                # b1
                pl.BlockSpec((N_DIGITS, H_PAD, C_PAD), lambda k: (0, 0, 0)),
                pl.BlockSpec((N_DIGITS, 1, C_PAD), lambda k: (0, 0, 0)),
            ],
            out_specs=(
                pl.BlockSpec((n_pad, n_pad), lambda k: (0, 0)),
                pl.BlockSpec((N_DIGITS, n_pad, C_PAD), lambda k: (0, 0, 0)),
            ),
            scratch_shapes=[pltpu.VMEM((n_pad, H_PAD), jnp.float32)],
        ),
        compiler_params=pltpu.CompilerParams(
            dimension_semantics=("arbitrary",),     # K is a reduction axis
            vmem_limit_bytes=32 << 20,              # safe on v5e/v6e/v7x
        ),
        cost_estimate=cost,
    )(x_pad, w1p, b1p, w2p, b2p)


# ----------------------------------------------------------------------------
# Kernel 2: joint probabilities + gaps for ALL clusters in one ungridded call
# ----------------------------------------------------------------------------
def _clusters_kernel(mask_ref, logp_ref, probs_ref, gaps_ref):
    g_pad, n_pad = mask_ref.shape
    masks = mask_ref[...]                                         # (G_pad, n_pad)
    masks_b = jnp.broadcast_to(masks[None], (N_DIGITS, g_pad, n_pad))
    # Masked sum of log-probs for every (digit, cluster) in one batched MXU
    # matmul; f32 accumulation keeps the NEG pad-class / log-space separation.
    s = jnp.einsum('dgn,dnc->dgc', masks_b, logp_ref[...],
                   preferred_element_type=jnp.float32)            # (13,G,128)
    mx = jnp.max(s, axis=2, keepdims=True)                        # log-space shift
    p = jnp.exp(s - mx)                                           # pad classes -> 0
    # Scaling a row by exp(-mx) is invariant under L2 normalize, so this
    # matches torch normalize(prod(softmax), dim=1) without f32 underflow.
    sumsq = jnp.sum(p * p, axis=2, keepdims=True)
    pr = p * lax.rsqrt(jnp.maximum(sumsq, 1e-24))                 # EUP rsqrt
    p0 = jnp.max(pr, axis=2, keepdims=True)
    gp = pr * pl.reciprocal(jnp.maximum(p0, 1e-20), approx=True)  # == 1-(p0-p)/p0
    # Zero out padded (all-empty) cluster rows so they never leak garbage.
    valid = (jnp.sum(masks, axis=1, keepdims=True) > 0.0).astype(jnp.float32)
    valid = valid[None]                                           # (1, G_pad, 1)
    probs_ref[...] = pr * valid
    gaps_ref[...] = gp * valid


@jax.jit
def cluster_joint(masks, logp):
    g_pad, n_pad = masks.shape
    vmem = pl.BlockSpec(memory_space=pltpu.MemorySpace.VMEM)
    cost = pl.CostEstimate(
        flops=int(2 * N_DIGITS * g_pad * n_pad * C_PAD
                  + 8 * N_DIGITS * g_pad * C_PAD),
        transcendentals=int(N_DIGITS * g_pad * (C_PAD + 2)),
        bytes_accessed=int(masks.size * 4 + logp.size * 4
                           + 2 * N_DIGITS * g_pad * C_PAD * 4),
    )
    return pl.pallas_call(
        _clusters_kernel,
        out_shape=(
            jax.ShapeDtypeStruct((N_DIGITS, g_pad, C_PAD), jnp.float32),
            jax.ShapeDtypeStruct((N_DIGITS, g_pad, C_PAD), jnp.float32),
        ),
        in_specs=[vmem, vmem],
        out_specs=(vmem, vmem),
        compiler_params=pltpu.CompilerParams(vmem_limit_bytes=32 << 20),
        cost_estimate=cost,
    )(masks, logp)


# ----------------------------------------------------------------------------
# Host-side logic reproduced from the PyTorch module
# ----------------------------------------------------------------------------
def checksum(arr):
    L = arr.shape[0]
    value, constant = 0, 1
    for i in range(1, L + 1):
        value += int(arr[L - i]) * constant
        constant = 1 if constant == 3 else 3
    return value % 10 == 0


def barcode_str(arr):
    return "".join(str(int(i)) for i in arr.tolist())


class BarcodeInferencerPallas:
    def __init__(self, feat_dim, hidden=32, size_exploration=25, topk=5,
                 threshold=0.8):
        self.threshold = threshold
        self.size_exploration = size_exploration
        self.topk = topk
        self.feat_dim = feat_dim
        self.k_pad = _round_up(feat_dim, TK)
        # deterministic synthetic MDCNN parameters (stand-in for checkpoint)
        key = jax.random.PRNGKey(42)
        k1, k2, k3, k4 = jax.random.split(key, 4)
        w1 = jax.random.normal(k1, (feat_dim, hidden), jnp.float32) * 0.05
        b1 = jax.random.normal(k2, (1, hidden), jnp.float32) * 0.01
        w2 = jax.random.normal(k3, (hidden, N_DIGITS * N_CLASSES),
                               jnp.float32) * 0.1
        b2 = jax.random.normal(k4, (1, N_DIGITS * N_CLASSES),
                               jnp.float32) * 0.01
        # lane-dense MXU layout: hidden padded 32->128, classes padded 10->128
        # with zero pad rows/cols so padded logits are exactly zero.
        self.w1p = jnp.pad(w1, ((0, self.k_pad - feat_dim),
                                (0, H_PAD - hidden))).astype(jnp.bfloat16)
        self.b1p = jnp.pad(b1, ((0, 0), (0, H_PAD - hidden)))
        w2r = jnp.transpose(w2.reshape(hidden, N_DIGITS, N_CLASSES), (1, 0, 2))
        self.w2p = jnp.pad(w2r, ((0, 0), (0, H_PAD - hidden),
                                 (0, C_PAD - N_CLASSES))).astype(jnp.bfloat16)
        self.b2p = jnp.pad(b2.reshape(N_DIGITS, 1, N_CLASSES),
                           ((0, 0), (0, 0), (0, C_PAD - N_CLASSES)))

    # ----- forward ----------------------------------------------------------
    def __call__(self, frames):
        if frames is None or frames.shape[0] == 0:
            return []
        n = frames.shape[0]
        n_pad = max(8, _round_up(n, 8))
        x = jnp.reshape(frames, (n, -1)).astype(jnp.float32)
        x_pad = jnp.pad(x, ((0, n_pad - n),
                            (0, self.k_pad - self.feat_dim))).astype(jnp.bfloat16)

        # launch 1: MDCNN head -> (similarity matrix, per-digit log-probs)
        sim_dev, logp_dev = fused_forward(x_pad, self.w1p, self.b1p,
                                          self.w2p, self.b2p)
        sim = np.asarray(sim_dev)[:n, :n]       # host sync #1 (needed to cluster)
        indexes = self._get_index_lists(sim, n)

        # launch 2: ALL clusters at once (masked log-prob sums via one matmul)
        g_pad = max(8, _round_up(len(indexes), 8))
        masks = np.zeros((g_pad, n_pad), np.float32)
        for g, index in enumerate(indexes):
            masks[g, np.asarray(index, dtype=np.int64)] = 1.0
        probs_dev, gaps_dev = cluster_joint(jnp.asarray(masks), logp_dev)
        probs_all, gaps_all = jax.device_get((probs_dev, gaps_dev))   # sync #2
        probs_all = np.transpose(probs_all, (1, 0, 2))[:, :, :N_CLASSES]
        gaps_all = np.transpose(gaps_all, (1, 0, 2))[:, :, :N_CLASSES]

        results = []
        for g, index in enumerate(indexes):
            probs = probs_all[g]
            gaps = gaps_all[g]
            sorted_probs = np.argsort(-probs, axis=1, kind="stable")

            options = {}
            initial_option = sorted_probs[:, 0].astype(np.int64)
            if checksum(initial_option) and self.topk == 1:
                results.append([barcode_str(initial_option)])
            else:
                posibilities = self._get_digit_posibilities(gaps, sorted_probs)
                self._log_checksum(options, probs, initial_option)
                self._explore(options, probs, initial_option, posibilities)
                if options:
                    results.append(
                        sorted(options, key=lambda x: options[x],
                               reverse=True)[0:self.topk])
        return results

    # ----- clustering (pandas apply reproduced in plain python) -------------
    def _get_index_lists(self, sim, n_frames):
        list_of_names = []
        for col in range(n_frames):
            x = sim[:, col]
            rows = [i for i in range(n_frames) if x[i] > self.threshold]
            list_of_tuples = [(i, col) for i in rows if col != i]
            if list_of_tuples:
                list_of_names.append(list_of_tuples)
        existing = {i: None for i in range(n_frames)}
        for lot in list_of_names:
            for i, j in lot:
                if existing[i] is None and existing[j] is None:
                    existing[i], existing[j] = i, i
                elif existing[i] is None and existing[j] is not None:
                    existing[i] = existing[j]
                elif existing[i] is not None and existing[j] is None:
                    existing[j] = existing[i]
                else:
                    continue
        fathers = []
        for key, value in existing.items():
            if key == value or value is None:
                fathers.append([key])
        for key, value in existing.items():
            if key == value:
                continue
            for f in fathers:
                if value == f[0]:
                    f.append(key)
        return fathers

    # ----- gaps / possibilities ---------------------------------------------
    def _get_top_gaps(self, gaps, sorted_probs):
        d = {}
        for position in range(N_DIGITS):
            for digit in sorted_probs[position]:
                d[f"{position}-{int(digit)}"] = float(gaps[position, int(digit)])
        return sorted(d.items(), key=lambda x: x[1],
                      reverse=True)[:self.size_exploration]

    def _get_digit_posibilities(self, gaps, sorted_probs):
        posibilities = {}
        for gap, _gain in self._get_top_gaps(gaps, sorted_probs):
            position, digit = gap.split("-")
            if position not in posibilities:
                posibilities[position] = []
            posibilities[position].append(float(digit))
        return {k: v[1:] for k, v in posibilities.items() if len(v) > 1}

    # ----- checksum exploration ----------------------------------------------
    def _log_checksum(self, options, probs, combination):
        if checksum(combination):
            bc = barcode_str(combination)
            probability = float(
                np.prod(probs[np.arange(N_DIGITS), combination.astype(np.int64)]))
            options[bc] = probability

    def _explore(self, options, probs, combination, posibilities,
                 combination_position=0):
        for position, _value in enumerate(combination[combination_position:]):
            position = combination_position + position
            if str(position) not in posibilities:
                continue
            new_combination = combination.copy()
            for posibility in posibilities[str(position)]:
                new_combination[position] = int(float(posibility))
                self._log_checksum(options, probs, new_combination)
                self._explore(options, probs, new_combination, posibilities,
                              position + 1)


# ----------------------------------------------------------------------------
if __name__ == "__main__":
    key = jax.random.PRNGKey(0)
    N, C, H, W = 6, 4, 16, 16
    frames = jax.random.normal(key, (N, C, H, W), jnp.float32)
    # duplicate a couple of frames so the similarity clustering is non-trivial
    frames = frames.at[1].set(frames[0])
    frames = frames.at[4].set(frames[3])

    inferencer = BarcodeInferencerPallas(feat_dim=C * H * W,
                                         size_exploration=25, topk=5,
                                         threshold=0.8)
    result = inferencer(frames)
    jax.block_until_ready(frames)
    print("KERNEL_OK")
</pallas_src>

<mosaic_0001>
module attributes {stable_mosaic.version = 11 : i64} {
  func.func @_forward_kernel(%arg0: i32, %arg1: memref<8x512xbf16, #tpu.memory_space<vmem>>, %arg2: memref<512x128xbf16, #tpu.memory_space<vmem>>, %arg3: memref<1x128xf32, #tpu.memory_space<vmem>>, %arg4: memref<13x128x128xbf16, #tpu.memory_space<vmem>>, %arg5: memref<13x1x128xf32, #tpu.memory_space<vmem>>, %arg6: memref<8x8xf32, #tpu.memory_space<vmem>>, %arg7: memref<13x8x128xf32, #tpu.memory_space<vmem>>, %arg8: memref<8x128xf32, #tpu.memory_space<vmem>>) attributes {dimension_semantics = [#tpu.dimension_semantics<arbitrary>], iteration_bounds = array<i64: 2>, scalar_prefetch = 0 : i64, scratch_operands = 1 : i64, tpu.core_type = #tpu.core_type<tc>, window_params = [{transform_indices = @transform_0, window_bounds = array<i64: 8, 512>}, {transform_indices = @transform_1, window_bounds = array<i64: 512, 128>}, {pipeline_mode = #tpu.pipeline_mode<synchronous>, transform_indices = @transform_2, window_bounds = array<i64: 1, 128>}, {pipeline_mode = #tpu.pipeline_mode<synchronous>, transform_indices = @transform_3, window_bounds = array<i64: 13, 128, 128>}, {pipeline_mode = #tpu.pipeline_mode<synchronous>, transform_indices = @transform_4, window_bounds = array<i64: 13, 1, 128>}, {pipeline_mode = #tpu.pipeline_mode<synchronous>, transform_indices = @transform_5, window_bounds = array<i64: 8, 8>}, {pipeline_mode = #tpu.pipeline_mode<synchronous>, transform_indices = @transform_6, window_bounds = array<i64: 13, 8, 128>}]} {
    %c0_i32 = arith.constant 0 : i32
    %0 = arith.cmpi eq, %arg0, %c0_i32 : i32
    %1 = arith.extui %0 : i1 to i32
    %c0_i32_0 = arith.constant 0 : i32
    %2 = arith.cmpi ne, %1, %c0_i32_0 : i32
    scf.if %2 {
      %cst_9 = arith.constant 0.000000e+00 : f32
      %12 = vector.broadcast %cst_9 : f32 to vector<8x128xf32>
      %c0_10 = arith.constant 0 : index
      %c0_11 = arith.constant 0 : index
      %13 = vector.load %arg8[%c0_10, %c0_11] : memref<8x128xf32, #tpu.memory_space<vmem>>, vector<8x128xf32>
      tpu.vector_store %arg8[%c0_10, %c0_11], %12 {strides = array<i32>} : memref<8x128xf32, #tpu.memory_space<vmem>>, vector<8x128xf32>,
    } else {
    }
    %c0 = arith.constant 0 : index
    %c0_1 = arith.constant 0 : index
    %3 = vector.load %arg8[%c0, %c0_1] : memref<8x128xf32, #tpu.memory_space<vmem>>, vector<8x128xf32>
    %c0_2 = arith.constant 0 : index
    %c0_3 = arith.constant 0 : index
    %4 = vector.load %arg1[%c0_2, %c0_3] : memref<8x512xbf16, #tpu.memory_space<vmem>>, vector<8x512xbf16>
    %c0_4 = arith.constant 0 : index
    %c0_5 = arith.constant 0 : index
    %5 = vector.load %arg2[%c0_4, %c0_5] : memref<512x128xbf16, #tpu.memory_space<vmem>>, vector<512x128xbf16>
    %cst = arith.constant dense<0.000000e+00> : vector<8x128xf32>
    %6 = tpu.matmul %4, %5, %cst {dimension_numbers = #tpu.dot_dimension_numbers<[1], [0], [0], [1], [0, 0, 1, 1], [], []>} : vector<8x512xbf16>, vector<512x128xbf16>, vector<8x128xf32> -> vector<8x128xf32>
    %7 = arith.addf %3, %6 : vector<8x128xf32>
    %c0_6 = arith.constant 0 : index
    %c0_7 = arith.constant 0 : index
    %8 = vector.load %arg8[%c0_6, %c0_7] : memref<8x128xf32, #tpu.memory_space<vmem>>, vector<8x128xf32>
    tpu.vector_store %arg8[%c0_6, %c0_7], %7 {strides = array<i32>} : memref<8x128xf32, #tpu.memory_space<vmem>>, vector<8x128xf32>,
    %c1_i32 = arith.constant 1 : i32
    %9 = arith.cmpi eq, %arg0, %c1_i32 : i32
    %10 = arith.extui %9 : i1 to i32
    %c0_i32_8 = arith.constant 0 : i32
    %11 = arith.cmpi ne, %10, %c0_i32_8 : i32
    scf.if %11 {
      %c0_9 = arith.constant 0 : index
      %c0_10 = arith.constant 0 : index
      %12 = vector.load %arg8[%c0_9, %c0_10] : memref<8x128xf32, #tpu.memory_space<vmem>>, vector<8x128xf32>
      %c0_11 = arith.constant 0 : index
      %c0_12 = arith.constant 0 : index
      %13 = vector.load %arg3[%c0_11, %c0_12] : memref<1x128xf32, #tpu.memory_space<vmem>>, vector<1x128xf32>
      %14 = vector.broadcast %13 : vector<1x128xf32> to vector<8x128xf32>
      %15 = arith.addf %12, %14 : vector<8x128xf32>
      %cst_13 = arith.constant 0.000000e+00 : f32
      %16 = vector.broadcast %cst_13 : f32 to vector<8x128xf32>
      %17 = arith.maximumf %15, %16 : vector<8x128xf32>
      %18 = arith.truncf %17 : vector<8x128xf32> to vector<8x128xbf16>
      %19 = vector.shape_cast %18 : vector<8x128xbf16> to vector<1x8x128xbf16>
      %20 = vector.shape_cast %19 : vector<1x8x128xbf16> to vector<1x8x128xbf16>
      %21 = vector.broadcast %20 : vector<1x8x128xbf16> to vector<13x8x128xbf16>
      %c0_14 = arith.constant 0 : index
      %c0_15 = arith.constant 0 : index
      %c0_16 = arith.constant 0 : index
      %22 = vector.load %arg4[%c0_14, %c0_15, %c0_16] : memref<13x128x128xbf16, #tpu.memory_space<vmem>>, vector<13x128x128xbf16>
      "tpu.trace_start"() <{level = 10 : i32, message = "dnk,dkc->dnc"}> : () -> ()
      %cst_17 = arith.constant dense<0.000000e+00> : vector<13x8x128xf32>
      %23 = tpu.matmul %21, %22, %cst_17 {dimension_numbers = #tpu.dot_dimension_numbers<[2], [1], [1], [2], [0, 0, 0, 1, 1, 2], [0], [0]>} : vector<13x8x128xbf16>, vector<13x128x128xbf16>, vector<13x8x128xf32> -> vector<13x8x128xf32>
      "tpu.trace_stop"() : () -> ()
      %c0_18 = arith.constant 0 : index
      %c0_19 = arith.constant 0 : index
      %c0_20 = arith.constant 0 : index
      %24 = vector.load %arg5[%c0_18, %c0_19, %c0_20] : memref<13x1x128xf32, #tpu.memory_space<vmem>>, vector<13x1x128xf32>
      %25 = vector.broadcast %24 : vector<13x1x128xf32> to vector<13x8x128xf32>
      %26 = arith.addf %23, %25 : vector<13x8x128xf32>
      %27 = arith.mulf %26, %26 : vector<13x8x128xf32>
      %cst_21 = arith.constant dense<0.000000e+00> : vector<13x8xf32>
      %28 = vector.multi_reduction <add>, %27, %cst_21 [2] : vector<13x8x128xf32> to vector<13x8xf32>
      %29 = vector.shape_cast %28 : vector<13x8xf32> to vector<13x8x1xf32>
      %cst_22 = arith.constant dense<0.000000e+00> : vector<8x1xf32>
      %30 = vector.multi_reduction <add>, %29, %cst_22 [0] : vector<13x8x1xf32> to vector<8x1xf32>
      %31 = vector.shape_cast %30 : vector<8x1xf32> to vector<1x8x1xf32>
      %cst_23 = arith.constant 9.99999996E-13 : f32
      %32 = vector.broadcast %cst_23 : f32 to vector<1x8x1xf32>
      %33 = arith.maximumf %31, %32 : vector<1x8x1xf32>
      %34 = math.rsqrt %33 : vector<1x8x1xf32>
      %35 = vector.broadcast %34 : vector<1x8x1xf32> to vector<13x8x128xf32>
      %36 = arith.mulf %26, %35 : vector<13x8x128xf32>
      %37 = arith.truncf %36 : vector<13x8x128xf32> to vector<13x8x128xbf16>
      "tpu.trace_start"() <{level = 10 : i32, message = "dnc,dmc->dnm"}> : () -> ()
      %cst_24 = arith.constant dense<0.000000e+00> : vector<13x8x8xf32>
      %38 = tpu.matmul %37, %37, %cst_24 {dimension_numbers = #tpu.dot_dimension_numbers<[2], [2], [1], [1], [0, 0, 0, 1, 1, 1], [0], [0]>} : vector<13x8x128xbf16>, vector<13x8x128xbf16>, vector<13x8x8xf32> -> vector<13x8x8xf32>
      "tpu.trace_stop"() : () -> ()
      %cst_25 = arith.constant dense<0.000000e+00> : vector<8x8xf32>
      %39 = vector.multi_reduction <add>, %38, %cst_25 [0] : vector<13x8x8xf32> to vector<8x8xf32>
      %c0_26 = arith.constant 0 : index
      %c0_27 = arith.constant 0 : index
      %40 = vector.load %arg6[%c0_26, %c0_27] : memref<8x8xf32, #tpu.memory_space<vmem>>, vector<8x8xf32>
      tpu.vector_store %arg6[%c0_26, %c0_27], %39 {strides = array<i32>} : memref<8x8xf32, #tpu.memory_space<vmem>>, vector<8x8xf32>,
      %41 = tpu.iota {dimensions = array<i32: 2>} : vector<13x8x128xi32>
      %c10_i32 = arith.constant 10 : i32
      %42 = vector.broadcast %c10_i32 : i32 to vector<13x8x128xi32>
      %43 = arith.cmpi slt, %41, %42 : vector<13x8x128xi32>
      %cst_28 = arith.constant -1.000000e+09 : f32
      %44 = vector.broadcast %cst_28 : f32 to vector<13x8x128xf32>
      %45 = arith.select %43, %26, %44 : vector<13x8x128xi1>, vector<13x8x128xf32>
      %cst_29 = arith.constant dense<0xFF800000> : vector<13x8xf32>
      %46 = vector.multi_reduction <maximumf>, %45, %cst_29 [2] : vector<13x8x128xf32> to vector<13x8xf32>
      %47 = vector.shape_cast %46 : vector<13x8xf32> to vector<13x8x1xf32>
      %48 = vector.broadcast %47 : vector<13x8x1xf32> to vector<13x8x128xf32>
      %49 = arith.subf %45, %48 : vector<13x8x128xf32>
      %50 = math.exp %49 : vector<13x8x128xf32>
      %cst_30 = arith.constant dense<0.000000e+00> : vector<13x8xf32>
      %51 = vector.multi_reduction <add>, %50, %cst_30 [2] : vector<13x8x128xf32> to vector<13x8xf32>
      %52 = vector.shape_cast %51 : vector<13x8xf32> to vector<13x8x1xf32>
      %53 = math.log %52 : vector<13x8x1xf32>
      %54 = arith.addf %47, %53 : vector<13x8x1xf32>
      %55 = vector.broadcast %54 : vector<13x8x1xf32> to vector<13x8x128xf32>
      %56 = arith.subf %45, %55 : vector<13x8x128xf32>
      %c0_31 = arith.constant 0 : index
      %c0_32 = arith.constant 0 : index
      %c0_33 = arith.constant 0 : index
      %57 = vector.load %arg7[%c0_31, %c0_32, %c0_33] : memref<13x8x128xf32, #tpu.memory_space<vmem>>, vector<13x8x128xf32>
      tpu.vector_store %arg7[%c0_31, %c0_32, %c0_33], %56 {strides = array<i32>} : memref<13x8x128xf32, #tpu.memory_space<vmem>>, vector<13x8x128xf32>,
    } else {
    }
    return
  }
  func.func @transform_0(%arg0: i32) -> (i32, i32) {
    %c0_i32 = arith.constant 0 : i32
    %c0_i32_0 = arith.constant 0 : i32
    return %c0_i32, %arg0 : i32, i32
  }
  func.func @transform_1(%arg0: i32) -> (i32, i32) {
    %c0_i32 = arith.constant 0 : i32
    %c0_i32_0 = arith.constant 0 : i32
    return %arg0, %c0_i32 : i32, i32
  }
  func.func @transform_2(%arg0: i32) -> (i32, i32) {
    %c0_i32 = arith.constant 0 : i32
    %c0_i32_0 = arith.constant 0 : i32
    %c0_i32_1 = arith.constant 0 : i32
    return %c0_i32, %c0_i32_0 : i32, i32
  }
  func.func @transform_3(%arg0: i32) -> (i32, i32, i32) {
    %c0_i32 = arith.constant 0 : i32
    %c0_i32_0 = arith.constant 0 : i32
    %c0_i32_1 = arith.constant 0 : i32
    %c0_i32_2 = arith.constant 0 : i32
    return %c0_i32, %c0_i32_0, %c0_i32_1 : i32, i32, i32
  }
  func.func @transform_4(%arg0: i32) -> (i32, i32, i32) {
    %c0_i32 = arith.constant 0 : i32
    %c0_i32_0 = arith.constant 0 : i32
    %c0_i32_1 = arith.constant 0 : i32
    %c0_i32_2 = arith.constant 0 : i32
    return %c0_i32, %c0_i32_0, %c0_i32_1 : i32, i32, i32
  }
  func.func @transform_5(%arg0: i32) -> (i32, i32) {
    %c0_i32 = arith.constant 0 : i32
    %c0_i32_0 = arith.constant 0 : i32
    %c0_i32_1 = arith.constant 0 : i32
    return %c0_i32, %c0_i32_0 : i32, i32
  }
  func.func @transform_6(%arg0: i32) -> (i32, i32, i32) {
    %c0_i32 = arith.constant 0 : i32
    %c0_i32_0 = arith.constant 0 : i32
    %c0_i32_1 = arith.constant 0 : i32
    %c0_i32_2 = arith.constant 0 : i32
    return %c0_i32, %c0_i32_0, %c0_i32_1 : i32, i32, i32
  }
}

</mosaic_0001>

<llo_original>
// kernel: fused_forward.1
$region0: #{fused_forward.1}
  #allocation0 [shape = 'u32[]', space=smem, size = 0x4, offset = 0x4, fixed_abs, tag = 'smem constant byte address 0x4 - core index']
  #allocation1 [shape = 'u32[72,128]{1,0:T(1,128)}', space=vmem, size = 0x9000, scoped, tag = 'internal scratch']
  #allocation2 [shape = 'f32[8,128]{1,0:T(8,128)}', space=vmem, size = 0x1000, scoped, tag = 'scratch operand']
  %s0 = inlined_call_operand.hbm [shape: bf16[8,1024], index: 0, kind: input, shape index: {}]
  %s1 = inlined_call_operand.hbm [shape: bf16[1024,128], index: 1, kind: input, shape index: {}]
  %s2 = inlined_call_operand.vmem [shape: f32[1,128], index: 2, kind: input, shape index: {}]
  %s3 = inlined_call_operand.hbm [shape: bf16[13,128,128], index: 3, kind: input, shape index: {}]
  %s4 = inlined_call_operand.hbm [shape: f32[13,1,128], index: 4, kind: input, shape index: {}]
  %s5 = inlined_call_operand.hbm [shape: f32[8,8], index: 5, kind: output, shape index: {0}]
  %s6 = inlined_call_operand.hbm [shape: f32[13,8,128], index: 6, kind: output, shape index: {1}]
  %7 = xla_tuple %s5, %s6
  %s8 = sld [smem:[#allocation0]]
  $region85: #{fused_forward.1} parent=0
    _
  %s10 = ssub.s32 1, %s8
  %s11 = scalar_select 0, %s10, %s8
  $region1: #{fused_forward.1} parent=0
    #allocation3 [shape = 'u8[16384]{0}', space=vmem, size = 0x4000, scoped, tag = 'input window, operand 0']
    #allocation4 [shape = 's32[2]{0}', space=sflag, size = 0x8, scoped, tag = 'scoped memory for fused_forward.1']
    #allocation5 [shape = 's32[2]{0}', space=sflag, size = 0x8, scoped, tag = 'scoped memory for fused_forward.1']
    #allocation6 [shape = 'u8[262144]{0}', space=vmem, size = 0x40000, scoped, tag = 'input window, operand 1']
    #allocation7 [shape = 's32[2]{0}', space=sflag, size = 0x8, scoped, tag = 'scoped memory for fused_forward.1']
    #allocation8 [shape = 'u8[425984]{0}', space=vmem, size = 0x68000, scoped, tag = 'input window, operand 3, single buffered']
    #allocation9 [shape = 'u8[6656]{0}', space=vmem, size = 0x1c00, scoped, tag = 'input window, operand 4, single buffered']
    #allocation10 [shape = 's32[1]{0}', space=sflag, size = 0x4, scoped, tag = 'scoped memory for fused_forward.1']
    #allocation11 [shape = 'u8[4096]{0}', space=vmem, size = 0x1000, scoped, tag = 'output window, operand 0, single buffered']
    #allocation12 [shape = 'u8[53248]{0}', space=vmem, size = 0xd000, scoped, tag = 'output window, operand 1, single buffered']
    #allocation13 [shape = 's32[1]{0}', space=sflag, size = 0x4, scoped, tag = 'scoped memory for fused_forward.1']
    %12 = vsyncpa [#allocation4], 0
    %s13 = scalar_lea.sflag [#allocation4], 1
    %14 = vsyncpa %s13, 0
    %15 = vsyncpa [#allocation7], 0
    %s16 = scalar_lea.sflag [#allocation7], 1
    %17 = vsyncpa %s16, 0
    %18 = vsyncpa [#allocation10], 0
    %19 = vsyncpa [#allocation5], 0
    %20 = vsyncpa [#allocation13], 0
    loop: start=0, step=1, limit=4
    $region2: #{fused_forward.1} parent=1 // loop_pre_header
      _
    $region3: #{fused_forward.1} parent=1 // loop_header
      %s22 = sphi 0, %s26
      %p23 = scmp.ge.s32.totalorder %s22, 4
      %s32 = sphi 0, %s34
      %s35 = sphi 0, %s32
      %s36 = sphi 0, %s35
      %s52 = sphi 0, %s36
      %s58 = sphi 0, %s60
      %s61 = sphi 0, %s58
      %s62 = sphi 0, %s61
      %s78 = sphi 0, %s62
      %s82 = sphi 0, %s82
      %s84 = sphi 0, %s82
      %s85 = sphi 0, %s84
      %s99 = sphi 0, %s85
      %s103 = sphi 0, %s103
      %s105 = sphi 0, %s103
      %s106 = sphi 0, %s105
      %s120 = sphi 0, %s106
      %s124 = sphi 0, %s124
      %s126 = sphi 0, %s124
      %s127 = sphi 0, %s126
      %s141 = sphi 0, %s127
      %s145 = sphi 0, %s145
      %s147 = sphi 0, %s145
      %s148 = sphi 0, %s147
      %s162 = sphi 0, %s148
      %s166 = sphi 0, %s166
      %s168 = sphi 0, %s166
      %s169 = sphi 0, %s168
      %s183 = sphi 0, %s169
    $region4: #{fused_forward.1} parent=1 // loop_header_branch
      %25 = sbr.rel (%p23) target = $region8
    $region5: #{fused_forward.1} parent=1 // loop_body
      %s27 = ssub.s32 %s22, 1
      %s28 = ssub.s32 %s22, 2
      %s29 = sadd.s32 %s22, 1
      %s30 = ssub.s32 %s22, %s29
      %p31 = scmp.eq.s32.totalorder %s30, 0
      %s33 = sadd.s32 %s32, 1
      %s34 = scalar_select %p31, %s32, %s33
      %p37 = pneg %p31
      %p38 = scmp.eq.s32.totalorder %s22, 1
      %p39 = por %p37, %p38
      %p40 = scmp.ne.s32.totalorder %s32, %s35
      %p41 = scmp.eq.s32.totalorder %s22, 0
      %p42 = por %p40, %p41
      %p43 = scmp.ne.s32.totalorder %s32, %s35
      %p44 = scmp.eq.s32.totalorder %s27, 1
      %p45 = por %p43, %p44
      %p46 = scmp.ne.s32.totalorder %s35, %s36
      %p47 = scmp.eq.s32.totalorder %s27, 0
      %p48 = por %p46, %p47
      %p49 = scmp.ne.s32.totalorder %s35, %s36
      %p50 = scmp.eq.s32.totalorder %s28, 1
      %p51 = por %p49, %p50
      %p53 = scmp.ne.s32.totalorder %s36, %s52
      %p54 = scmp.eq.s32.totalorder %s28, 0
      %p55 = por %p53, %p54
      %s56 = ssub.s32 %s22, %s29
      %p57 = scmp.eq.s32.totalorder %s56, 0
      %s59 = sadd.s32 %s58, 1
      %s60 = scalar_select %p57, %s58, %s59
      %p63 = pneg %p57
      %p64 = scmp.eq.s32.totalorder %s22, 1
      %p65 = por %p63, %p64
      %p66 = scmp.ne.s32.totalorder %s58, %s61
      %p67 = scmp.eq.s32.totalorder %s22, 0
      %p68 = por %p66, %p67
      %p69 = scmp.ne.s32.totalorder %s58, %s61
      %p70 = scmp.eq.s32.totalorder %s27, 1
      %p71 = por %p69, %p70
      %p72 = scmp.ne.s32.totalorder %s61, %s62
      %p73 = scmp.eq.s32.totalorder %s27, 0
      %p74 = por %p72, %p73
      %p75 = scmp.ne.s32.totalorder %s61, %s62
      %p76 = scmp.eq.s32.totalorder %s28, 1
      %p77 = por %p75, %p76
      %p79 = scmp.ne.s32.totalorder %s62, %s78
      %p80 = scmp.eq.s32.totalorder %s28, 0
      %p81 = por %p79, %p80
      %s83 = sadd.s32 %s82, 1
      %p86 = scmp.eq.s32.totalorder %s22, 1
      %p87 = scmp.ne.s32.totalorder %s82, %s84
      %p88 = scmp.eq.s32.totalorder %s22, 0
      %p89 = por %p87, %p88
      %p90 = scmp.ne.s32.totalorder %s82, %s84
      %p91 = scmp.eq.s32.totalorder %s27, 1
      %p92 = por %p90, %p91
      %p93 = scmp.ne.s32.totalorder %s84, %s85
      %p94 = scmp.eq.s32.totalorder %s27, 0
      %p95 = por %p93, %p94
      %p96 = scmp.ne.s32.totalorder %s84, %s85
      %p97 = scmp.eq.s32.totalorder %s28, 1
      %p98 = por %p96, %p97
      %p100 = scmp.ne.s32.totalorder %s85, %s99
      %p101 = scmp.eq.s32.totalorder %s28, 0
      %p102 = por %p100, %p101
      %s104 = sadd.s32 %s103, 1
      %p107 = scmp.eq.s32.totalorder %s22, 1
      %p108 = scmp.ne.s32.totalorder %s103, %s105
      %p109 = scmp.eq.s32.totalorder %s22, 0
      %p110 = por %p108, %p109
      %p111 = scmp.ne.s32.totalorder %s103, %s105
      %p112 = scmp.eq.s32.totalorder %s27, 1
      %p113 = por %p111, %p112
      %p114 = scmp.ne.s32.totalorder %s105, %s106
      %p115 = scmp.eq.s32.totalorder %s27, 0
      %p116 = por %p114, %p115
      %p117 = scmp.ne.s32.totalorder %s105, %s106
      %p118 = scmp.eq.s32.totalorder %s28, 1
      %p119 = por %p117, %p118
      %p121 = scmp.ne.s32.totalorder %s106, %s120
      %p122 = scmp.eq.s32.totalorder %s28, 0
      %p123 = por %p121, %p122
      %s125 = sadd.s32 %s124, 1
      %p128 = scmp.eq.s32.totalorder %s22, 1
      %p129 = scmp.ne.s32.totalorder %s124, %s126
      %p130 = scmp.eq.s32.totalorder %s22, 0
      %p131 = por %p129, %p130
      %p132 = scmp.ne.s32.totalorder %s124, %s126
      %p133 = scmp.eq.s32.totalorder %s27, 1
      %p134 = por %p132, %p133
      %p135 = scmp.ne.s32.totalorder %s126, %s127
      %p136 = scmp.eq.s32.totalorder %s27, 0
      %p137 = por %p135, %p136
      %p138 = scmp.ne.s32.totalorder %s126, %s127
      %p139 = scmp.eq.s32.totalorder %s28, 1
      %p140 = por %p138, %p139
      %p142 = scmp.ne.s32.totalorder %s127, %s141
      %p143 = scmp.eq.s32.totalorder %s28, 0
      %p144 = por %p142, %p143
      %s146 = sadd.s32 %s145, 1
      %p149 = scmp.eq.s32.totalorder %s22, 1
      %p150 = scmp.ne.s32.totalorder %s145, %s147
      %p151 = scmp.eq.s32.totalorder %s22, 0
      %p152 = por %p150, %p151
      %p153 = scmp.ne.s32.totalorder %s145, %s147
      %p154 = scmp.eq.s32.totalorder %s27, 1
      %p155 = por %p153, %p154
      %p156 = scmp.ne.s32.totalorder %s147, %s148
      %p157 = scmp.eq.s32.totalorder %s27, 0
      %p158 = por %p156, %p157
      %p159 = scmp.ne.s32.totalorder %s147, %s148
      %p160 = scmp.eq.s32.totalorder %s28, 1
      %p161 = por %p159, %p160
      %p163 = scmp.ne.s32.totalorder %s148, %s162
      %p164 = scmp.eq.s32.totalorder %s28, 0
      %p165 = por %p163, %p164
      %s167 = sadd.s32 %s166, 1
      %p170 = scmp.eq.s32.totalorder %s22, 1
      %p171 = scmp.ne.s32.totalorder %s166, %s168
      %p172 = scmp.eq.s32.totalorder %s22, 0
      %p173 = por %p171, %p172
      %p174 = scmp.ne.s32.totalorder %s166, %s168
      %p175 = scmp.eq.s32.totalorder %s27, 1
      %p176 = por %p174, %p175
      %p177 = scmp.ne.s32.totalorder %s168, %s169
      %p178 = scmp.eq.s32.totalorder %s27, 0
      %p179 = por %p177, %p178
      %p180 = scmp.ne.s32.totalorder %s168, %s169
      %p181 = scmp.eq.s32.totalorder %s28, 1
      %p182 = por %p180, %p181
      %p184 = scmp.ne.s32.totalorder %s169, %s183
      %p185 = scmp.eq.s32.totalorder %s28, 0
      %p186 = por %p184, %p185
      %p187 = scmp.le.s32.totalorder 1, %s22
      %p188 = scmp.lt.s32.totalorder %s22, 3
      %p189 = pnand %p187, %p188
      %p190 = pneg %p189
      // Predicated region
      $region9: #{fused_forward.1} parent=5 // pred_check
        _
      $region10: #{fused_forward.1} parent=5 // pred_check_branch
        %192 = sbr.rel (%p189) target = $region12
      $region11: #{fused_forward.1} parent=5 // pred_region
        %s193 = ssub.s32 %s22, 1
        // Predicated region
        $region13: #{fused_forward.1} parent=11 // pred_check
          %p194 = pneg %p95
        $region14: #{fused_forward.1} parent=11 // pred_check_branch
          %196 = sbr.rel (%p194) target = $region16
        $region15: #{fused_forward.1} parent=11 // pred_region
          _
        $region16: #{fused_forward.1} parent=11 // pred_fallthru
          _
        // Predicated region
        $region17: #{fused_forward.1} parent=11 // pred_check
          %p197 = pneg %p116
        $region18: #{fused_forward.1} parent=11 // pred_check_branch
          %199 = sbr.rel (%p197) target = $region20
        $region19: #{fused_forward.1} parent=11 // pred_region
          %201 = vsyncadd [#allocation7], 0
          %s202 = sshll.u32 %s3, 4
          %s203 = int_to_ptr.hbm [resolvable:$true] %s202
          %s204 = sshll.u32 [#allocation8], 4
          %s205 = int_to_ptr.vmem [resolvable:$true] %s204
          %210 = dma.hbm_to_vmem [thread:$0]  %s203, 13312, %s205, [#allocation7], 64, 64, 4
        $region20: #{fused_forward.1} parent=11 // pred_fallthru
          _
        // Predicated region
        $region21: #{fused_forward.1} parent=11 // pred_check
          %p211 = pneg %p137
        $region22: #{fused_forward.1} parent=11 // pred_check_branch
          %213 = sbr.rel (%p211) target = $region24
        $region23: #{fused_forward.1} parent=11 // pred_region
          %215 = vsyncadd [#allocation10], 0
          %s216 = sshll.u32 %s4, 4
          %s217 = int_to_ptr.hbm [resolvable:$true] %s216
          %s218 = sshll.u32 [#allocation9], 4
          %s219 = int_to_ptr.vmem [resolvable:$true] %s218
          %224 = dma.hbm_to_vmem [thread:$0]  %s217, 208, %s219, [#allocation10], 16, 16, 1
        $region24: #{fused_forward.1} parent=11 // pred_fallthru
          _
      $region12: #{fused_forward.1} parent=5 // pred_fallthru
        _
      %p225 = scmp.lt.s32.totalorder %s22, 2
      // Predicated region
      $region25: #{fused_forward.1} parent=5 // pred_check
        %p226 = pneg %p225
      $region26: #{fused_forward.1} parent=5 // pred_check_branch
        %228 = sbr.rel (%p226) target = $region28
      $region27: #{fused_forward.1} parent=5 // pred_region
        // Predicated region
        $region29: #{fused_forward.1} parent=27 // pred_check
          %p229 = pneg %p42
        $region30: #{fused_forward.1} parent=27 // pred_check_branch
          %231 = sbr.rel (%p229) target = $region32
        $region31: #{fused_forward.1} parent=27 // pred_region
          %s232 = sand.u32 %s32, 1
          %s233 = scalar_lea.sflag [#allocation4], %s232
          %s234 = sand.u32 %s32, 1
          %s235 = smul.addr %s234, 16
          %s236 = scalar_lea.vmem [#allocation3], %s235
          %s237 = smul.u32 4, %s22
          %239 = vsyncadd %s233, 0
          %s240 = smul.addr %s237, 4
          %s241 = scalar_lea.hbm %s0, %s240
          %s243 = sshll.u32 %s241, 4
          %s244 = int_to_ptr.hbm [resolvable:$true] %s243
          %s245 = sshll.u32 %s236, 4
          %s246 = int_to_ptr.vmem [resolvable:$true] %s245
          %248 = dma.hbm_to_vmem [thread:$0]  %s244, 256, %s246, %s233
        $region32: #{fused_forward.1} parent=27 // pred_fallthru
          _
        // Predicated region
        $region33: #{fused_forward.1} parent=27 // pred_check
          %p249 = pneg %p68
        $region34: #{fused_forward.1} parent=27 // pred_check_branch
          %251 = sbr.rel (%p249) target = $region36
        $region35: #{fused_forward.1} parent=27 // pred_region
          %s252 = sand.u32 %s22, 1
          %s253 = scalar_lea.sflag [#allocation7], %s252
          %s254 = sand.u32 %s58, 1
          %s255 = smul.addr %s254, 256
          %s256 = scalar_lea.vmem [#allocation6], %s255
          %s257 = smul.u32 64, %s22
          %259 = vsyncadd %s253, 0
          %s260 = smul.addr %s257, 4
          %s261 = scalar_lea.hbm %s1, %s260
          %s262 = sshll.u32 %s261, 4
          %s263 = int_to_ptr.hbm [resolvable:$true] %s262
          %s264 = sshll.u32 %s256, 4
          %s265 = int_to_ptr.vmem [resolvable:$true] %s264
          %270 = dma.hbm_to_vmem [thread:$0]  %s263, 4096, %s265, %s253, 64, 64, 4
        $region36: #{fused_forward.1} parent=27 // pred_fallthru
          _
      $region28: #{fused_forward.1} parent=5 // pred_fallthru
        _
      %p271 = scmp.le.s32.totalorder 1, %s22
      %p272 = scmp.lt.s32.totalorder %s22, 3
      %p273 = pnand %p271, %p272
      %p274 = pneg %p273
      // Predicated region
      $region37: #{fused_forward.1} parent=5 // pred_check
        _
      $region38: #{fused_forward.1} parent=5 // pred_check_branch
        %276 = sbr.rel (%p273) target = $region40
      $region39: #{fused_forward.1} parent=5 // pred_region
        %s277 = ssub.s32 %s22, 1
        %s278 = sand.u32 %s35, 1
        %s279 = scalar_lea.sflag [#allocation4], %s278
        %s280 = sand.u32 %s35, 1
        %s281 = smul.addr %s280, 16
        %s282 = scalar_lea.vmem [#allocation3], %s281
        // Predicated region
        $region41: #{fused_forward.1} parent=39 // pred_check
          %p283 = pneg %p48
        $region42: #{fused_forward.1} parent=39 // pred_check_branch
          %285 = sbr.rel (%p283) target = $region44
        $region43: #{fused_forward.1} parent=39 // pred_region
          %287 = dma.done %s279, 256
        $region44: #{fused_forward.1} parent=39 // pred_fallthru
          _
        %s288 = sand.u32 %s27, 1
        %s289 = scalar_lea.sflag [#allocation7], %s288
        %s290 = sand.u32 %s61, 1
        %s291 = smul.addr %s290, 256
        %s292 = scalar_lea.vmem [#allocation6], %s291
        // Predicated region
        $region45: #{fused_forward.1} parent=39 // pred_check
          %p293 = pneg %p74
        $region46: #{fused_forward.1} parent=39 // pred_check_branch
          %295 = sbr.rel (%p293) target = $region48
        $region47: #{fused_forward.1} parent=39 // pred_region
          %297 = dma.done %s289, 4096
        $region48: #{fused_forward.1} parent=39 // pred_fallthru
          _
        // Predicated region
        $region49: #{fused_forward.1} parent=39 // pred_check
          %p298 = pneg %p116
        $region50: #{fused_forward.1} parent=39 // pred_check_branch
          %300 = sbr.rel (%p298) target = $region52
        $region51: #{fused_forward.1} parent=39 // pred_region
          %302 = dma.done [#allocation7], 13312
        $region52: #{fused_forward.1} parent=39 // pred_fallthru
          _
        // Predicated region
        $region53: #{fused_forward.1} parent=39 // pred_check
          %p303 = pneg %p137
        $region54: #{fused_forward.1} parent=39 // pred_check_branch
          %305 = sbr.rel (%p303) target = $region56
        $region55: #{fused_forward.1} parent=39 // pred_region
          %307 = dma.done [#allocation10], 208
        $region56: #{fused_forward.1} parent=39 // pred_fallthru
          _
        %s308 = sand.u32 %s35, 1
        %s309 = scalar_lea.sflag [#allocation4], %s308
        %s310 = sand.u32 %s35, 1
        %s311 = smul.addr %s310, 16
        %s312 = scalar_lea.vmem [#allocation3], %s311
        %p313 = pneg %p48
        %p314 = pneg %p45
        %s315 = sand.u32 %s27, 1
        %s316 = scalar_lea.sflag [#allocation7], %s315
        %s317 = sand.u32 %s61, 1
        %s318 = smul.addr %s317, 256
        %s319 = scalar_lea.vmem [#allocation6], %s318
        %p320 = pneg %p74
        %p321 = pneg %p71
        %p322 = pneg %p95
        %p323 = pneg %p92
        %p324 = pneg %p116
        %p325 = pneg %p113
        %p326 = pneg %p137
        %p327 = pneg %p134
        %p328 = pneg %p158
        %p329 = pneg %p155
        %p330 = pneg %p179
        %p331 = pneg %p176
        %s332 = smul.u32 4, %s27
        %s333 = smul.u32 64, %s27
        %p335 = scmp.eq.s32.totalorder %s27, 0
        // Predicated region
        $region57: #{fused_forward.1} parent=39 // pred_check
          %p336 = pneg %p335
        $region58: #{fused_forward.1} parent=39 // pred_check_branch
          %338 = sbr.rel (%p336) target = $region60
        $region59: #{fused_forward.1} parent=39 // pred_region
          %339 = vst [vmem:[#allocation2] sm:$0xff] 0.0
        $region60: #{fused_forward.1} parent=39 // pred_fallthru
          _
        %v340 = vld [vmem:[#allocation2] sm:$0xff]
        %v341 = vld [vmem:[%s282] sm:$0xff]
        %v342 = vld [vmem:[%s282 + $0x8] sm:$0xff]
        %v343 = vld [vmem:[%s292] sm:$0xf]
        %v344 = vld [vmem:[%s292 + $0x4] sm:$0xf]
        %v345 = vld [vmem:[%s292 + $0x8] sm:$0xf]
        %v346 = vld [vmem:[%s292 + $0xc] sm:$0xf]
        %v347 = vld [vmem:[%s292 + $0x10] sm:$0xf]
        %v348 = vld [vmem:[%s292 + $0x14] sm:$0xf]
        %v349 = vld [vmem:[%s292 + $0x18] sm:$0xf]
        %v350 = vld [vmem:[%s292 + $0x1c] sm:$0xf]
        %v351 = vld [vmem:[%s292 + $0x20] sm:$0xf]
        %v352 = vld [vmem:[%s292 + $0x24] sm:$0xf]
        %v353 = vld [vmem:[%s292 + $0x28] sm:$0xf]
        %v354 = vld [vmem:[%s292 + $0x2c] sm:$0xf]
        %v355 = vld [vmem:[%s292 + $0x30] sm:$0xf]
        %v356 = vld [vmem:[%s292 + $0x34] sm:$0xf]
        %v357 = vld [vmem:[%s292 + $0x38] sm:$0xf]
        %v358 = vld [vmem:[%s292 + $0x3c] sm:$0xf]
        %v359 = vld [vmem:[%s292 + $0x40] sm:$0xf]
        %v360 = vld [vmem:[%s292 + $0x44] sm:$0xf]
        %v361 = vld [vmem:[%s292 + $0x48] sm:$0xf]
        %v362 = vld [vmem:[%s292 + $0x4c] sm:$0xf]
        %v363 = vld [vmem:[%s292 + $0x50] sm:$0xf]
        %v364 = vld [vmem:[%s292 + $0x54] sm:$0xf]
        %v365 = vld [vmem:[%s292 + $0x58] sm:$0xf]
        %v366 = vld [vmem:[%s292 + $0x5c] sm:$0xf]
        %v367 = vld [vmem:[%s292 + $0x60] sm:$0xf]
        %v368 = vld [vmem:[%s292 + $0x64] sm:$0xf]
        %v369 = vld [vmem:[%s292 + $0x68] sm:$0xf]
        %v370 = vld [vmem:[%s292 + $0x6c] sm:$0xf]
        %v371 = vld [vmem:[%s292 + $0x70] sm:$0xf]
        %v372 = vld [vmem:[%s292 + $0x74] sm:$0xf]
        %v373 = vld [vmem:[%s292 + $0x78] sm:$0xf]
        %v374 = vld [vmem:[%s292 + $0x7c] sm:$0xf]
        %v375 = vld [vmem:[%s292 + $0x80] sm:$0xf]
        %v376 = vld [vmem:[%s292 + $0x84] sm:$0xf]
        %v377 = vld [vmem:[%s292 + $0x88] sm:$0xf]
        %v378 = vld [vmem:[%s292 + $0x8c] sm:$0xf]
        %v379 = vld [vmem:[%s292 + $0x90] sm:$0xf]
        %v380 = vld [vmem:[%s292 + $0x94] sm:$0xf]
        %v381 = vld [vmem:[%s292 + $0x98] sm:$0xf]
        %v382 = vld [vmem:[%s292 + $0x9c] sm:$0xf]
        %v383 = vld [vmem:[%s292 + $0xa0] sm:$0xf]
        %v384 = vld [vmem:[%s292 + $0xa4] sm:$0xf]
        %v385 = vld [vmem:[%s292 + $0xa8] sm:$0xf]
        %v386 = vld [vmem:[%s292 + $0xac] sm:$0xf]
        %v387 = vld [vmem:[%s292 + $0xb0] sm:$0xf]
        %v388 = vld [vmem:[%s292 + $0xb4] sm:$0xf]
        %v389 = vld [vmem:[%s292 + $0xb8] sm:$0xf]
        %v390 = vld [vmem:[%s292 + $0xbc] sm:$0xf]
        %v391 = vld [vmem:[%s292 + $0xc0] sm:$0xf]
        %v392 = vld [vmem:[%s292 + $0xc4] sm:$0xf]
        %v393 = vld [vmem:[%s292 + $0xc8] sm:$0xf]
        %v394 = vld [vmem:[%s292 + $0xcc] sm:$0xf]
        %v395 = vld [vmem:[%s292 + $0xd0] sm:$0xf]
        %v396 = vld [vmem:[%s292 + $0xd4] sm:$0xf]
        %v397 = vld [vmem:[%s292 + $0xd8] sm:$0xf]
        %v398 = vld [vmem:[%s292 + $0xdc] sm:$0xf]
        %v399 = vld [vmem:[%s292 + $0xe0] sm:$0xf]
        %v400 = vld [vmem:[%s292 + $0xe4] sm:$0xf]
        %v401 = vld [vmem:[%s292 + $0xe8] sm:$0xf]
        %v402 = vld [vmem:[%s292 + $0xec] sm:$0xf]
        %v403 = vld [vmem:[%s292 + $0xf0] sm:$0xf]
        %v404 = vld [vmem:[%s292 + $0xf4] sm:$0xf]
        %v405 = vld [vmem:[%s292 + $0xf8] sm:$0xf]
        %v406 = vld [vmem:[%s292 + $0xfc] sm:$0xf]
        %v409 = vunpack.c.l.b16 %v341
        %v410 = vunpack.c.h.b16 %v341
        %v411 = vunpack.c.l.b16 %v342
        %v412 = vunpack.c.h.b16 %v342
        %v413 = vpack.c.b16 %v409, %v409
        %v414 = vpack.c.b16 %v410, %v410
        %v415 = vpack.c.b16 %v411, %v411
        %v416 = vpack.c.b16 %v412, %v412
        %v485 = vunpack.c.l.b16 %v343
        %v486 = vunpack.c.l.b16 %v344
        %v487 = vunpack.c.l.b16 %v345
        %v488 = vunpack.c.l.b16 %v346
        %v489 = vunpack.c.l.b16 %v347
        %v490 = vunpack.c.l.b16 %v348
        %v491 = vunpack.c.l.b16 %v349
        %v492 = vunpack.c.l.b16 %v350
        %v493 = vunpack.c.l.b16 %v351
        %v494 = vunpack.c.l.b16 %v352
        %v495 = vunpack.c.l.b16 %v353
        %v496 = vunpack.c.l.b16 %v354
        %v497 = vunpack.c.l.b16 %v355
        %v498 = vunpack.c.l.b16 %v356
        %v499 = vunpack.c.l.b16 %v357
        %v500 = vunpack.c.l.b16 %v358
        %v501 = vunpack.c.l.b16 %v359
        %v502 = vunpack.c.l.b16 %v360
        %v503 = vunpack.c.l.b16 %v361
        %v504 = vunpack.c.l.b16 %v362
        %v505 = vunpack.c.l.b16 %v363
        %v506 = vunpack.c.l.b16 %v364
        %v507 = vunpack.c.l.b16 %v365
        %v508 = vunpack.c.l.b16 %v366
        %v509 = vunpack.c.l.b16 %v367
        %v510 = vunpack.c.l.b16 %v368
        %v511 = vunpack.c.l.b16 %v369
        %v512 = vunpack.c.l.b16 %v370
        %v513 = vunpack.c.l.b16 %v371
        %v514 = vunpack.c.l.b16 %v372
        %v515 = vunpack.c.l.b16 %v373
        %v516 = vunpack.c.l.b16 %v374
        %v517 = vunpack.c.l.b16 %v375
        %v518 = vunpack.c.l.b16 %v376
        %v519 = vunpack.c.l.b16 %v377
        %v520 = vunpack.c.l.b16 %v378
        %v521 = vunpack.c.l.b16 %v379
        %v522 = vunpack.c.l.b16 %v380
        %v523 = vunpack.c.l.b16 %v381
        %v524 = vunpack.c.l.b16 %v382
        %v525 = vunpack.c.l.b16 %v383
        %v526 = vunpack.c.l.b16 %v384
        %v527 = vunpack.c.l.b16 %v385
        %v528 = vunpack.c.l.b16 %v386
        %v529 = vunpack.c.l.b16 %v387
        %v530 = vunpack.c.l.b16 %v388
        %v531 = vunpack.c.l.b16 %v389
        %v532 = vunpack.c.l.b16 %v390
        %v533 = vunpack.c.l.b16 %v391
        %v534 = vunpack.c.l.b16 %v392
        %v535 = vunpack.c.l.b16 %v393
        %v536 = vunpack.c.l.b16 %v394
        %v537 = vunpack.c.l.b16 %v395
        %v538 = vunpack.c.l.b16 %v396
        %v539 = vunpack.c.l.b16 %v397
        %v540 = vunpack.c.l.b16 %v398
        %v541 = vunpack.c.l.b16 %v399
        %v542 = vunpack.c.l.b16 %v400
        %v543 = vunpack.c.l.b16 %v401
        %v544 = vunpack.c.l.b16 %v402
        %v545 = vunpack.c.l.b16 %v403
        %v546 = vunpack.c.l.b16 %v404
        %v547 = vunpack.c.l.b16 %v405
        %v548 = vunpack.c.l.b16 %v406
        %v549 = vpack.c.b16 %v486, %v485
        %v550 = vpack.c.b16 %v488, %v487
        %v551 = vpack.c.b16 %v490, %v489
        %v552 = vpack.c.b16 %v492, %v491
        %v553 = vpack.c.b16 %v494, %v493
        %v554 = vpack.c.b16 %v496, %v495
        %v555 = vpack.c.b16 %v498, %v497
        %v556 = vpack.c.b16 %v500, %v499
        %v557 = vpack.c.b16 %v502, %v501
        %v558 = vpack.c.b16 %v504, %v503
        %v559 = vpack.c.b16 %v506, %v505
        %v560 = vpack.c.b16 %v508, %v507
        %v561 = vpack.c.b16 %v510, %v509
        %v562 = vpack.c.b16 %v512, %v511
        %v563 = vpack.c.b16 %v514, %v513
        %v564 = vpack.c.b16 %v516, %v515
        %v565 = vpack.c.b16 %v518, %v517
        %v566 = vpack.c.b16 %v520, %v519
        %v567 = vpack.c.b16 %v522, %v521
        %v568 = vpack.c.b16 %v524, %v523
        %v569 = vpack.c.b16 %v526, %v525
        %v570 = vpack.c.b16 %v528, %v527
        %v571 = vpack.c.b16 %v530, %v529
        %v572 = vpack.c.b16 %v532, %v531
        %v573 = vpack.c.b16 %v534, %v533
        %v574 = vpack.c.b16 %v536, %v535
        %v575 = vpack.c.b16 %v538, %v537
        %v576 = vpack.c.b16 %v540, %v539
        %v577 = vpack.c.b16 %v542, %v541
        %v578 = vpack.c.b16 %v544, %v543
        %v579 = vpack.c.b16 %v546, %v545
        %v580 = vpack.c.b16 %v548, %v547
        %613 = vmatpush.bf16.msra.mxu0 %v556
        %614 = vmatpush.bf16.msra.mxu0 %v555
        %615 = vmatpush.bf16.msra.mxu0 %v554
        %616 = vmatpush.bf16.msra.mxu0 %v553
        %617 = vmatpush.bf16.msra.mxu0 %v552
        %618 = vmatpush.bf16.msra.mxu0 %v551
        %619 = vmatpush.bf16.msra.mxu0 %v550
        %620 = vmatpush.bf16.msra.mxu0 %v549
        %621 = vmatmul.bf16.gmra.mxu0 %v413
        %v622 = vpop.f32.mrf.mxu0
        %v623 = vadd.f32 0.0, %v622
        %v624 = vpop.f32.mrf.mxu0
        %625 = vdwg.mxu0
        %626 = vmatpush.bf16.msra.mxu0 %v564
        %627 = vmatpush.bf16.msra.mxu0 %v563
        %628 = vmatpush.bf16.msra.mxu0 %v562
        %629 = vmatpush.bf16.msra.mxu0 %v561
        %630 = vmatpush.bf16.msra.mxu0 %v560
        %631 = vmatpush.bf16.msra.mxu0 %v559
        %632 = vmatpush.bf16.msra.mxu0 %v558
        %633 = vmatpush.bf16.msra.mxu0 %v557
        %634 = vmatmul.bf16.gmra.mxu0 %v414
        %v635 = vpop.f32.mrf.mxu0
        %v636 = vadd.f32 %v623, %v635
        %v637 = vpop.f32.mrf.mxu0
        %638 = vdwg.mxu0
        %639 = vmatpush.bf16.msra.mxu0 %v572
        %640 = vmatpush.bf16.msra.mxu0 %v571
        %641 = vmatpush.bf16.msra.mxu0 %v570
        %642 = vmatpush.bf16.msra.mxu0 %v569
        %643 = vmatpush.bf16.msra.mxu0 %v568
        %644 = vmatpush.bf16.msra.mxu0 %v567
        %645 = vmatpush.bf16.msra.mxu0 %v566
        %646 = vmatpush.bf16.msra.mxu0 %v565
        %647 = vmatmul.bf16.gmra.mxu0 %v415
        %v648 = vpop.f32.mrf.mxu0
        %v649 = vadd.f32 %v636, %v648
        %v650 = vpop.f32.mrf.mxu0
        %651 = vdwg.mxu0
        %652 = vmatpush.bf16.msra.mxu0 %v580
        %653 = vmatpush.bf16.msra.mxu0 %v579
        %654 = vmatpush.bf16.msra.mxu0 %v578
        %655 = vmatpush.bf16.msra.mxu0 %v577
        %656 = vmatpush.bf16.msra.mxu0 %v576
        %657 = vmatpush.bf16.msra.mxu0 %v575
        %658 = vmatpush.bf16.msra.mxu0 %v574
        %659 = vmatpush.bf16.msra.mxu0 %v573
        %660 = vmatmul.bf16.gmra.mxu0 %v416
        %v661 = vpop.f32.mrf.mxu0
        %v662 = vadd.f32 %v649, %v661
        %v663 = vpop.f32.mrf.mxu0
        %664 = vdwg.mxu0
        %v665 = vadd.f32 %v340, %v662
        %666 = vst [vmem:[#allocation2] sm:$0xff] %v665
        %p667 = scmp.eq.s32.totalorder %s27, 1
        // Predicated region
        $region61: #{fused_forward.1} parent=39 // pred_check
          %p668 = pneg %p667
        $region62: #{fused_forward.1} parent=39 // pred_check_branch
          %670 = sbr.rel (%p668) target = $region64
        $region63: #{fused_forward.1} parent=39 // pred_region
          %v671 = vld [vmem:[#allocation2] sm:$0xff]
          %v672 = vld [vmem:[%s2] sm:$0x1]
          %v674 = vperm.slane %v672, 0
          %v676 = vadd.f32 %v671, %v674
          %v677 = vmax.f32 %v676, 0.0
          %v678 = vpack.c.bf16 %v677, %v677
          %v679 = vld [vmem:[#allocation8] sm:$0xf]
          %v680 = vld [vmem:[#allocation8 + $0x4] sm:$0xf]
          %v681 = vld [vmem:[#allocation8 + $0x8] sm:$0xf]
          %v682 = vld [vmem:[#allocation8 + $0xc] sm:$0xf]
          %v683 = vld [vmem:[#allocation8 + $0x10] sm:$0xf]
          %v684 = vld [vmem:[#allocation8 + $0x14] sm:$0xf]
          %v685 = vld [vmem:[#allocation8 + $0x18] sm:$0xf]
          %v686 = vld [vmem:[#allocation8 + $0x1c] sm:$0xf]
          %v687 = vld [vmem:[#allocation8 + $0x20] sm:$0xf]
          %v688 = vld [vmem:[#allocation8 + $0x24] sm:$0xf]
          %v689 = vld [vmem:[#allocation8 + $0x28] sm:$0xf]
          %v690 = vld [vmem:[#allocation8 + $0x2c] sm:$0xf]
          %v691 = vld [vmem:[#allocation8 + $0x30] sm:$0xf]
          %v692 = vld [vmem:[#allocation8 + $0x34] sm:$0xf]
          %v693 = vld [vmem:[#allocation8 + $0x38] sm:$0xf]
          %v694 = vld [vmem:[#allocation8 + $0x3c] sm:$0xf]
          %v695 = vld [vmem:[#allocation8 + $0x40] sm:$0xf]
          %v696 = vld [vmem:[#allocation8 + $0x44] sm:$0xf]
          %v697 = vld [vmem:[#allocation8 + $0x48] sm:$0xf]
          %v698 = vld [vmem:[#allocation8 + $0x4c] sm:$0xf]
          %v699 = vld [vmem:[#allocation8 + $0x50] sm:$0xf]
          %v700 = vld [vmem:[#allocation8 + $0x54] sm:$0xf]
          %v701 = vld [vmem:[#allocation8 + $0x58] sm:$0xf]
          %v702 = vld [vmem:[#allocation8 + $0x5c] sm:$0xf]
          %v703 = vld [vmem:[#allocation8 + $0x60] sm:$0xf]
          %v704 = vld [vmem:[#allocation8 + $0x64] sm:$0xf]
          %v705 = vld [vmem:[#allocation8 + $0x68] sm:$0xf]
          %v706 = vld [vmem:[#allocation8 + $0x6c] sm:$0xf]
          %v707 = vld [vmem:[#allocation8 + $0x70] sm:$0xf]
          %v708 = vld [vmem:[#allocation8 + $0x74] sm:$0xf]
          %v709 = vld [vmem:[#allocation8 + $0x78] sm:$0xf]
          %v710 = vld [vmem:[#allocation8 + $0x7c] sm:$0xf]
          %v711 = vld [vmem:[#allocation8 + $0x80] sm:$0xf]
          %v712 = vld [vmem:[#allocation8 + $0x84] sm:$0xf]
          %v713 = vld [vmem:[#allocation8 + $0x88] sm:$0xf]
          %v714 = vld [vmem:[#allocation8 + $0x8c] sm:$0xf]
          %v715 = vld [vmem:[#allocation8 + $0x90] sm:$0xf]
          %v716 = vld [vmem:[#allocation8 + $0x94] sm:$0xf]
          %v717 = vld [vmem:[#allocation8 + $0x98] sm:$0xf]
          %v718 = vld [vmem:[#allocation8 + $0x9c] sm:$0xf]
          %v719 = vld [vmem:[#allocation8 + $0xa0] sm:$0xf]
          %v720 = vld [vmem:[#allocation8 + $0xa4] sm:$0xf]
          %v721 = vld [vmem:[#allocation8 + $0xa8] sm:$0xf]
          %v722 = vld [vmem:[#allocation8 + $0xac] sm:$0xf]
          %v723 = vld [vmem:[#allocation8 + $0xb0] sm:$0xf]
          %v724 = vld [vmem:[#allocation8 + $0xb4] sm:$0xf]
          %v725 = vld [vmem:[#allocation8 + $0xb8] sm:$0xf]
          %v726 = vld [vmem:[#allocation8 + $0xbc] sm:$0xf]
          %v727 = vld [vmem:[#allocation8 + $0xc0] sm:$0xf]
          %v728 = vld [vmem:[#allocation8 + $0xc4] sm:$0xf]
          %v729 = vld [vmem:[#allocation8 + $0xc8] sm:$0xf]
          %v730 = vld [vmem:[#allocation8 + $0xcc] sm:$0xf]
          %v731 = vld [vmem:[#allocation8 + $0xd0] sm:$0xf]
          %v732 = vld [vmem:[#allocation8 + $0xd4] sm:$0xf]
          %v733 = vld [vmem:[#allocation8 + $0xd8] sm:$0xf]
          %v734 = vld [vmem:[#allocation8 + $0xdc] sm:$0xf]
          %v735 = vld [vmem:[#allocation8 + $0xe0] sm:$0xf]
          %v736 = vld [vmem:[#allocation8 + $0xe4] sm:$0xf]
          %v737 = vld [vmem:[#allocation8 + $0xe8] sm:$0xf]
          %v738 = vld [vmem:[#allocation8 + $0xec] sm:$0xf]
          %v739 = vld [vmem:[#allocation8 + $0xf0] sm:$0xf]
          %v740 = vld [vmem:[#allocation8 + $0xf4] sm:$0xf]
          %v741 = vld [vmem:[#allocation8 + $0xf8] sm:$0xf]
          %v742 = vld [vmem:[#allocation8 + $0xfc] sm:$0xf]
          %v743 = vld [vmem:[#allocation8 + $0x100] sm:$0xf]
          %v744 = vld [vmem:[#allocation8 + $0x104] sm:$0xf]
          %v745 = vld [vmem:[#allocation8 + $0x108] sm:$0xf]
          %v746 = vld [vmem:[#allocation8 + $0x10c] sm:$0xf]
          %v747 = vld [vmem:[#allocation8 + $0x110] sm:$0xf]
          %v748 = vld [vmem:[#allocation8 + $0x114] sm:$0xf]
          %v749 = vld [vmem:[#allocation8 + $0x118] sm:$0xf]
          %v750 = vld [vmem:[#allocation8 + $0x11c] sm:$0xf]
          %v751 = vld [vmem:[#allocation8 + $0x120] sm:$0xf]
          %v752 = vld [vmem:[#allocation8 + $0x124] sm:$0xf]
          %v753 = vld [vmem:[#allocation8 + $0x128] sm:$0xf]
          %v754 = vld [vmem:[#allocation8 + $0x12c] sm:$0xf]
          %v755 = vld [vmem:[#allocation8 + $0x130] sm:$0xf]
          %v756 = vld [vmem:[#allocation8 + $0x134] sm:$0xf]
          %v757 = vld [vmem:[#allocation8 + $0x138] sm:$0xf]
          %v758 = vld [vmem:[#allocation8 + $0x13c] sm:$0xf]
          %v759 = vld [vmem:[#allocation8 + $0x140] sm:$0xf]
          %v760 = vld [vmem:[#allocation8 + $0x144] sm:$0xf]
          %v761 = vld [vmem:[#allocation8 + $0x148] sm:$0xf]
          %v762 = vld [vmem:[#allocation8 + $0x14c] sm:$0xf]
          %v763 = vld [vmem:[#allocation8 + $0x150] sm:$0xf]
          %v764 = vld [vmem:[#allocation8 + $0x154] sm:$0xf]
          %v765 = vld [vmem:[#allocation8 + $0x158] sm:$0xf]
          %v766 = vld [vmem:[#allocation8 + $0x15c] sm:$0xf]
          %v767 = vld [vmem:[#allocation8 + $0x160] sm:$0xf]
          %v768 = vld [vmem:[#allocation8 + $0x164] sm:$0xf]
          %v769 = vld [vmem:[#allocation8 + $0x168] sm:$0xf]
          %v770 = vld [vmem:[#allocation8 + $0x16c] sm:$0xf]
          %v771 = vld [vmem:[#allocation8 + $0x170] sm:$0xf]
          %v772 = vld [vmem:[#allocation8 + $0x174] sm:$0xf]
          %v773 = vld [vmem:[#allocation8 + $0x178] sm:$0xf]
          %v774 = vld [vmem:[#allocation8 + $0x17c] sm:$0xf]
          %v775 = vld [vmem:[#allocation8 + $0x180] sm:$0xf]
          %v776 = vld [vmem:[#allocation8 + $0x184] sm:$0xf]
          %v777 = vld [vmem:[#allocation8 + $0x188] sm:$0xf]
          %v778 = vld [vmem:[#allocation8 + $0x18c] sm:$0xf]
          %v779 = vld [vmem:[#allocation8 + $0x190] sm:$0xf]
          %v780 = vld [vmem:[#allocation8 + $0x194] sm:$0xf]
          %v781 = vld [vmem:[#allocation8 + $0x198] sm:$0xf]
          %v782 = vld [vmem:[#allocation8 + $0x19c] sm:$0xf]
          %v783 = vld [vmem:[#allocation8 + $0x1a0] sm:$0xf]
          %v784 = vld [vmem:[#allocation8 + $0x1a4] sm:$0xf]
          %v785 = vld [vmem:[#allocation8 + $0x1a8] sm:$0xf]
          %v786 = vld [vmem:[#allocation8 + $0x1ac] sm:$0xf]
          %v787 = vld [vmem:[#allocation8 + $0x1b0] sm:$0xf]
          %v788 = vld [vmem:[#allocation8 + $0x1b4] sm:$0xf]
          %v789 = vld [vmem:[#allocation8 + $0x1b8] sm:$0xf]
          %v790 = vld [vmem:[#allocation8 + $0x1bc] sm:$0xf]
          %v791 = vld [vmem:[#allocation8 + $0x1c0] sm:$0xf]
          %v792 = vld [vmem:[#allocation8 + $0x1c4] sm:$0xf]
          %v793 = vld [vmem:[#allocation8 + $0x1c8] sm:$0xf]
          %v794 = vld [vmem:[#allocation8 + $0x1cc] sm:$0xf]
          %v795 = vld [vmem:[#allocation8 + $0x1d0] sm:$0xf]
          %v796 = vld [vmem:[#allocation8 + $0x1d4] sm:$0xf]
          %v797 = vld [vmem:[#allocation8 + $0x1d8] sm:$0xf]
          %v798 = vld [vmem:[#allocation8 + $0x1dc] sm:$0xf]
          %v799 = vld [vmem:[#allocation8 + $0x1e0] sm:$0xf]
          %v800 = vld [vmem:[#allocation8 + $0x1e4] sm:$0xf]
          %v801 = vld [vmem:[#allocation8 + $0x1e8] sm:$0xf]
          %v802 = vld [vmem:[#allocation8 + $0x1ec] sm:$0xf]
          %v803 = vld [vmem:[#allocation8 + $0x1f0] sm:$0xf]
          %v804 = vld [vmem:[#allocation8 + $0x1f4] sm:$0xf]
          %v805 = vld [vmem:[#allocation8 + $0x1f8] sm:$0xf]
          %v806 = vld [vmem:[#allocation8 + $0x1fc] sm:$0xf]
          %v807 = vld [vmem:[#allocation8 + $0x200] sm:$0xf]
          %v808 = vld [vmem:[#allocation8 + $0x204] sm:$0xf]
          %v809 = vld [vmem:[#allocation8 + $0x208] sm:$0xf]
          %v810 = vld [vmem:[#allocation8 + $0x20c] sm:$0xf]
          %v811 = vld [vmem:[#allocation8 + $0x210] sm:$0xf]
          %v812 = vld [vmem:[#allocation8 + $0x214] sm:$0xf]
          %v813 = vld [vmem:[#allocation8 + $0x218] sm:$0xf]
          %v814 = vld [vmem:[#allocation8 + $0x21c] sm:$0xf]
          %v815 = vld [vmem:[#allocation8 + $0x220] sm:$0xf]
          %v816 = vld [vmem:[#allocation8 + $0x224] sm:$0xf]
          %v817 = vld [vmem:[#allocation8 + $0x228] sm:$0xf]
          %v818 = vld [vmem:[#allocation8 + $0x22c] sm:$0xf]
          %v819 = vld [vmem:[#allocation8 + $0x230] sm:$0xf]
          %v820 = vld [vmem:[#allocation8 + $0x234] sm:$0xf]
          %v821 = vld [vmem:[#allocation8 + $0x238] sm:$0xf]
          %v822 = vld [vmem:[#allocation8 + $0x23c] sm:$0xf]
          %v823 = vld [vmem:[#allocation8 + $0x240] sm:$0xf]
          %v824 = vld [vmem:[#allocation8 + $0x244] sm:$0xf]
          %v825 = vld [vmem:[#allocation8 + $0x248] sm:$0xf]
          %v826 = vld [vmem:[#allocation8 + $0x24c] sm:$0xf]
          %v827 = vld [vmem:[#allocation8 + $0x250] sm:$0xf]
          %v828 = vld [vmem:[#allocation8 + $0x254] sm:$0xf]
          %v829 = vld [vmem:[#allocation8 + $0x258] sm:$0xf]
          %v830 = vld [vmem:[#allocation8 + $0x25c] sm:$0xf]
          %v831 = vld [vmem:[#allocation8 + $0x260] sm:$0xf]
          %v832 = vld [vmem:[#allocation8 + $0x264] sm:$0xf]
          %v833 = vld [vmem:[#allocation8 + $0x268] sm:$0xf]
          %v834 = vld [vmem:[#allocation8 + $0x26c] sm:$0xf]
          %v835 = vld [vmem:[#allocation8 + $0x270] sm:$0xf]
          %v836 = vld [vmem:[#allocation8 + $0x274] sm:$0xf]
          %v837 = vld [vmem:[#allocation8 + $0x278] sm:$0xf]
          %v838 = vld [vmem:[#allocation8 + $0x27c] sm:$0xf]
          %v839 = vld [vmem:[#allocation8 + $0x280] sm:$0xf]
          %v840 = vld [vmem:[#allocation8 + $0x284] sm:$0xf]
          %v841 = vld [vmem:[#allocation8 + $0x288] sm:$0xf]
          %v842 = vld [vmem:[#allocation8 + $0x28c] sm:$0xf]
          %v843 = vld [vmem:[#allocation8 + $0x290] sm:$0xf]
          %v844 = vld [vmem:[#allocation8 + $0x294] sm:$0xf]
          %v845 = vld [vmem:[#allocation8 + $0x298] sm:$0xf]
          %v846 = vld [vmem:[#allocation8 + $0x29c] sm:$0xf]
          %v847 = vld [vmem:[#allocation8 + $0x2a0] sm:$0xf]
          %v848 = vld [vmem:[#allocation8 + $0x2a4] sm:$0xf]
          %v849 = vld [vmem:[#allocation8 + $0x2a8] sm:$0xf]
          %v850 = vld [vmem:[#allocation8 + $0x2ac] sm:$0xf]
          %v851 = vld [vmem:[#allocation8 + $0x2b0] sm:$0xf]
          %v852 = vld [vmem:[#allocation8 + $0x2b4] sm:$0xf]
          %v853 = vld [vmem:[#allocation8 + $0x2b8] sm:$0xf]
          %v854 = vld [vmem:[#allocation8 + $0x2bc] sm:$0xf]
          %v855 = vld [vmem:[#allocation8 + $0x2c0] sm:$0xf]
          %v856 = vld [vmem:[#allocation8 + $0x2c4] sm:$0xf]
          %v857 = vld [vmem:[#allocation8 + $0x2c8] sm:$0xf]
          %v858 = vld [vmem:[#allocation8 + $0x2cc] sm:$0xf]
          %v859 = vld [vmem:[#allocation8 + $0x2d0] sm:$0xf]
          %v860 = vld [vmem:[#allocation8 + $0x2d4] sm:$0xf]
          %v861 = vld [vmem:[#allocation8 + $0x2d8] sm:$0xf]
          %v862 = vld [vmem:[#allocation8 + $0x2dc] sm:$0xf]
          %v863 = vld [vmem:[#allocation8 + $0x2e0] sm:$0xf]
          %v864 = vld [vmem:[#allocation8 + $0x2e4] sm:$0xf]
          %v865 = vld [vmem:[#allocation8 + $0x2e8] sm:$0xf]
          %v866 = vld [vmem:[#allocation8 + $0x2ec] sm:$0xf]
          %v867 = vld [vmem:[#allocation8 + $0x2f0] sm:$0xf]
          %v868 = vld [vmem:[#allocation8 + $0x2f4] sm:$0xf]
          %v869 = vld [vmem:[#allocation8 + $0x2f8] sm:$0xf]
          %v870 = vld [vmem:[#allocation8 + $0x2fc] sm:$0xf]
          %v871 = vld [vmem:[#allocation8 + $0x300] sm:$0xf]
          %v872 = vld [vmem:[#allocation8 + $0x304] sm:$0xf]
          %v873 = vld [vmem:[#allocation8 + $0x308] sm:$0xf]
          %v874 = vld [vmem:[#allocation8 + $0x30c] sm:$0xf]
          %v875 = vld [vmem:[#allocation8 + $0x310] sm:$0xf]
          %v876 = vld [vmem:[#allocation8 + $0x314] sm:$0xf]
          %v877 = vld [vmem:[#allocation8 + $0x318] sm:$0xf]
          %v878 = vld [vmem:[#allocation8 + $0x31c] sm:$0xf]
          %v879 = vld [vmem:[#allocation8 + $0x320] sm:$0xf]
          %v880 = vld [vmem:[#allocation8 + $0x324] sm:$0xf]
          %v881 = vld [vmem:[#allocation8 + $0x328] sm:$0xf]
          %v882 = vld [vmem:[#allocation8 + $0x32c] sm:$0xf]
          %v883 = vld [vmem:[#allocation8 + $0x330] sm:$0xf]
          %v884 = vld [vmem:[#allocation8 + $0x334] sm:$0xf]
          %v885 = vld [vmem:[#allocation8 + $0x338] sm:$0xf]
          %v886 = vld [vmem:[#allocation8 + $0x33c] sm:$0xf]
          %v887 = vld [vmem:[#allocation9] sm:$0x1]
          %v888 = vld [vmem:[#allocation9 + $0x1] sm:$0x1]
          %v889 = vld [vmem:[#allocation9 + $0x2] sm:$0x1]
          %v890 = vld [vmem:[#allocation9 + $0x3] sm:$0x1]
          %v891 = vld [vmem:[#allocation9 + $0x4] sm:$0x1]
          %v892 = vld [vmem:[#allocation9 + $0x5] sm:$0x1]
          %v893 = vld [vmem:[#allocation9 + $0x6] sm:$0x1]
          %v894 = vld [vmem:[#allocation9 + $0x7] sm:$0x1]
          %v895 = vld [vmem:[#allocation9 + $0x8] sm:$0x1]
          %v896 = vld [vmem:[#allocation9 + $0x9] sm:$0x1]
          %v897 = vld [vmem:[#allocation9 + $0xa] sm:$0x1]
          %v898 = vld [vmem:[#allocation9 + $0xb] sm:$0x1]
          %v899 = vld [vmem:[#allocation9 + $0xc] sm:$0x1]
          %v913 = vperm.slane %v887, 0
          %v914 = vperm.slane %v888, 0
          %v915 = vperm.slane %v889, 0
          %v916 = vperm.slane %v890, 0
          %v917 = vperm.slane %v891, 0
          %v918 = vperm.slane %v892, 0
          %v919 = vperm.slane %v893, 0
          %v920 = vperm.slane %v894, 0
          %v921 = vperm.slane %v895, 0
          %v922 = vperm.slane %v896, 0
          %v923 = vperm.slane %v897, 0
          %v924 = vperm.slane %v898, 0
          %v925 = vperm.slane %v899, 0
          %v955 = vunpack.c.l.b16 %v679
          %v956 = vunpack.c.l.b16 %v680
          %v957 = vunpack.c.l.b16 %v681
          %v958 = vunpack.c.l.b16 %v682
          %v959 = vunpack.c.l.b16 %v683
          %v960 = vunpack.c.l.b16 %v684
          %v961 = vunpack.c.l.b16 %v685
          %v962 = vunpack.c.l.b16 %v686
          %v963 = vunpack.c.l.b16 %v687
          %v964 = vunpack.c.l.b16 %v688
          %v965 = vunpack.c.l.b16 %v689
          %v966 = vunpack.c.l.b16 %v690
          %v967 = vunpack.c.l.b16 %v691
          %v968 = vunpack.c.l.b16 %v692
          %v969 = vunpack.c.l.b16 %v693
          %v970 = vunpack.c.l.b16 %v694
          %v971 = vpack.c.b16 %v956, %v955
          %v972 = vpack.c.b16 %v958, %v957
          %v973 = vpack.c.b16 %v960, %v959
          %v974 = vpack.c.b16 %v962, %v961
          %v975 = vpack.c.b16 %v964, %v963
          %v976 = vpack.c.b16 %v966, %v965
          %v977 = vpack.c.b16 %v968, %v967
          %v978 = vpack.c.b16 %v970, %v969
          %987 = vmatpush.bf16.msra.mxu0 %v978
          %988 = vmatpush.bf16.msra.mxu0 %v977
          %989 = vmatpush.bf16.msra.mxu0 %v976
          %990 = vmatpush.bf16.msra.mxu0 %v975
          %991 = vmatpush.bf16.msra.mxu0 %v974
          %992 = vmatpush.bf16.msra.mxu0 %v973
          %993 = vmatpush.bf16.msra.mxu0 %v972
          %994 = vmatpush.bf16.msra.mxu0 %v971
          %995 = vmatmul.bf16.gmra.mxu0 %v678
          %v996 = vpop.f32.mrf.mxu0
          %v997 = vadd.f32 %v913, %v996
          %v998 = vpop.f32.mrf.mxu0
          %999 = vdwg.mxu0
          %v1016 = vunpack.c.l.b16 %v695
          %v1017 = vunpack.c.l.b16 %v696
          %v1018 = vunpack.c.l.b16 %v697
          %v1019 = vunpack.c.l.b16 %v698
          %v1020 = vunpack.c.l.b16 %v699
          %v1021 = vunpack.c.l.b16 %v700
          %v1022 = vunpack.c.l.b16 %v701
          %v1023 = vunpack.c.l.b16 %v702
          %v1024 = vunpack.c.l.b16 %v703
          %v1025 = vunpack.c.l.b16 %v704
          %v1026 = vunpack.c.l.b16 %v705
          %v1027 = vunpack.c.l.b16 %v706
          %v1028 = vunpack.c.l.b16 %v707
          %v1029 = vunpack.c.l.b16 %v708
          %v1030 = vunpack.c.l.b16 %v709
          %v1031 = vunpack.c.l.b16 %v710
          %v1032 = vpack.c.b16 %v1017, %v1016
          %v1033 = vpack.c.b16 %v1019, %v1018
          %v1034 = vpack.c.b16 %v1021, %v1020
          %v1035 = vpack.c.b16 %v1023, %v1022
          %v1036 = vpack.c.b16 %v1025, %v1024
          %v1037 = vpack.c.b16 %v1027, %v1026
          %v1038 = vpack.c.b16 %v1029, %v1028
          %v1039 = vpack.c.b16 %v1031, %v1030
          %1048 = vmatpush.bf16.msra.mxu0 %v1039
          %1049 = vmatpush.bf16.msra.mxu0 %v1038
          %1050 = vmatpush.bf16.msra.mxu0 %v1037
          %1051 = vmatpush.bf16.msra.mxu0 %v1036
          %1052 = vmatpush.bf16.msra.mxu0 %v1035
          %1053 = vmatpush.bf16.msra.mxu0 %v1034
          %1054 = vmatpush.bf16.msra.mxu0 %v1033
          %1055 = vmatpush.bf16.msra.mxu0 %v1032
          %1056 = vmatmul.bf16.gmra.mxu0 %v678
          %v1057 = vpop.f32.mrf.mxu0
          %v1058 = vadd.f32 %v914, %v1057
          %v1059 = vpop.f32.mrf.mxu0
          %1060 = vdwg.mxu0
          %v1077 = vunpack.c.l.b16 %v711
          %v1078 = vunpack.c.l.b16 %v712
          %v1079 = vunpack.c.l.b16 %v713
          %v1080 = vunpack.c.l.b16 %v714
          %v1081 = vunpack.c.l.b16 %v715
          %v1082 = vunpack.c.l.b16 %v716
          %v1083 = vunpack.c.l.b16 %v717
          %v1084 = vunpack.c.l.b16 %v718
          %v1085 = vunpack.c.l.b16 %v719
          %v1086 = vunpack.c.l.b16 %v720
          %v1087 = vunpack.c.l.b16 %v721
          %v1088 = vunpack.c.l.b16 %v722
          %v1089 = vunpack.c.l.b16 %v723
          %v1090 = vunpack.c.l.b16 %v724
          %v1091 = vunpack.c.l.b16 %v725
          %v1092 = vunpack.c.l.b16 %v726
          %v1093 = vpack.c.b16 %v1078, %v1077
          %v1094 = vpack.c.b16 %v1080, %v1079
          %v1095 = vpack.c.b16 %v1082, %v1081
          %v1096 = vpack.c.b16 %v1084, %v1083
          %v1097 = vpack.c.b16 %v1086, %v1085
          %v1098 = vpack.c.b16 %v1088, %v1087
          %v1099 = vpack.c.b16 %v1090, %v1089
          %v1100 = vpack.c.b16 %v1092, %v1091
          %1109 = vmatpush.bf16.msra.mxu0 %v1100
          %1110 = vmatpush.bf16.msra.mxu0 %v1099
          %1111 = vmatpush.bf16.msra.mxu0 %v1098
          %1112 = vmatpush.bf16.msra.mxu0 %v1097
          %1113 = vmatpush.bf16.msra.mxu0 %v1096
          %1114 = vmatpush.bf16.msra.mxu0 %v1095
          %1115 = vmatpush.bf16.msra.mxu0 %v1094
          %1116 = vmatpush.bf16.msra.mxu0 %v1093
          %1117 = vmatmul.bf16.gmra.mxu0 %v678
          %v1118 = vpop.f32.mrf.mxu0
          %v1119 = vadd.f32 %v915, %v1118
          %v1120 = vpop.f32.mrf.mxu0
          %1121 = vdwg.mxu0
          %v1138 = vunpack.c.l.b16 %v727
          %v1139 = vunpack.c.l.b16 %v728
          %v1140 = vunpack.c.l.b16 %v729
          %v1141 = vunpack.c.l.b16 %v730
          %v1142 = vunpack.c.l.b16 %v731
          %v1143 = vunpack.c.l.b16 %v732
          %v1144 = vunpack.c.l.b16 %v733
          %v1145 = vunpack.c.l.b16 %v734
          %v1146 = vunpack.c.l.b16 %v735
          %v1147 = vunpack.c.l.b16 %v736
          %v1148 = vunpack.c.l.b16 %v737
          %v1149 = vunpack.c.l.b16 %v738
          %v1150 = vunpack.c.l.b16 %v739
          %v1151 = vunpack.c.l.b16 %v740
          %v1152 = vunpack.c.l.b16 %v741
          %v1153 = vunpack.c.l.b16 %v742
          %v1154 = vpack.c.b16 %v1139, %v1138
          %v1155 = vpack.c.b16 %v1141, %v1140
          %v1156 = vpack.c.b16 %v1143, %v1142
          %v1157 = vpack.c.b16 %v1145, %v1144
          %v1158 = vpack.c.b16 %v1147, %v1146
          %v1159 = vpack.c.b16 %v1149, %v1148
          %v1160 = vpack.c.b16 %v1151, %v1150
          %v1161 = vpack.c.b16 %v1153, %v1152
          %1170 = vmatpush.bf16.msra.mxu0 %v1161
          %1171 = vmatpush.bf16.msra.mxu0 %v1160
          %1172 = vmatpush.bf16.msra.mxu0 %v1159
          %1173 = vmatpush.bf16.msra.mxu0 %v1158
          %1174 = vmatpush.bf16.msra.mxu0 %v1157
          %1175 = vmatpush.bf16.msra.mxu0 %v1156
          %1176 = vmatpush.bf16.msra.mxu0 %v1155
          %1177 = vmatpush.bf16.msra.mxu0 %v1154
          %1178 = vmatmul.bf16.gmra.mxu0 %v678
          %v1179 = vpop.f32.mrf.mxu0
          %v1180 = vadd.f32 %v916, %v1179
          %v1181 = vpop.f32.mrf.mxu0
          %1182 = vdwg.mxu0
          %v1199 = vunpack.c.l.b16 %v743
          %v1200 = vunpack.c.l.b16 %v744
          %v1201 = vunpack.c.l.b16 %v745
          %v1202 = vunpack.c.l.b16 %v746
          %v1203 = vunpack.c.l.b16 %v747
          %v1204 = vunpack.c.l.b16 %v748
          %v1205 = vunpack.c.l.b16 %v749
          %v1206 = vunpack.c.l.b16 %v750
          %v1207 = vunpack.c.l.b16 %v751
          %v1208 = vunpack.c.l.b16 %v752
          %v1209 = vunpack.c.l.b16 %v753
          %v1210 = vunpack.c.l.b16 %v754
          %v1211 = vunpack.c.l.b16 %v755
          %v1212 = vunpack.c.l.b16 %v756
          %v1213 = vunpack.c.l.b16 %v757
          %v1214 = vunpack.c.l.b16 %v758
          %v1215 = vpack.c.b16 %v1200, %v1199
          %v1216 = vpack.c.b16 %v1202, %v1201
          %v1217 = vpack.c.b16 %v1204, %v1203
          %v1218 = vpack.c.b16 %v1206, %v1205
          %v1219 = vpack.c.b16 %v1208, %v1207
          %v1220 = vpack.c.b16 %v1210, %v1209
          %v1221 = vpack.c.b16 %v1212, %v1211
          %v1222 = vpack.c.b16 %v1214, %v1213
          %1231 = vmatpush.bf16.msra.mxu0 %v1222
          %1232 = vmatpush.bf16.msra.mxu0 %v1221
          %1233 = vmatpush.bf16.msra.mxu0 %v1220
          %1234 = vmatpush.bf16.msra.mxu0 %v1219
          %1235 = vmatpush.bf16.msra.mxu0 %v1218
          %1236 = vmatpush.bf16.msra.mxu0 %v1217
          %1237 = vmatpush.bf16.msra.mxu0 %v1216
          %1238 = vmatpush.bf16.msra.mxu0 %v1215
          %1239 = vmatmul.bf16.gmra.mxu0 %v678
          %v1240 = vpop.f32.mrf.mxu0
          %v1241 = vadd.f32 %v917, %v1240
          %v1242 = vpop.f32.mrf.mxu0
          %1243 = vdwg.mxu0
          %v1260 = vunpack.c.l.b16 %v759
          %v1261 = vunpack.c.l.b16 %v760
          %v1262 = vunpack.c.l.b16 %v761
          %v1263 = vunpack.c.l.b16 %v762
          %v1264 = vunpack.c.l.b16 %v763
          %v1265 = vunpack.c.l.b16 %v764
          %v1266 = vunpack.c.l.b16 %v765
          %v1267 = vunpack.c.l.b16 %v766
          %v1268 = vunpack.c.l.b16 %v767
          %v1269 = vunpack.c.l.b16 %v768
          %v1270 = vunpack.c.l.b16 %v769
          %v1271 = vunpack.c.l.b16 %v770
          %v1272 = vunpack.c.l.b16 %v771
          %v1273 = vunpack.c.l.b16 %v772
          %v1274 = vunpack.c.l.b16 %v773
          %v1275 = vunpack.c.l.b16 %v774
          %v1276 = vpack.c.b16 %v1261, %v1260
          %v1277 = vpack.c.b16 %v1263, %v1262
          %v1278 = vpack.c.b16 %v1265, %v1264
          %v1279 = vpack.c.b16 %v1267, %v1266
          %v1280 = vpack.c.b16 %v1269, %v1268
          %v1281 = vpack.c.b16 %v1271, %v1270
          %v1282 = vpack.c.b16 %v1273, %v1272
          %v1283 = vpack.c.b16 %v1275, %v1274
          %1292 = vmatpush.bf16.msra.mxu0 %v1283
          %1293 = vmatpush.bf16.msra.mxu0 %v1282
          %1294 = vmatpush.bf16.msra.mxu0 %v1281
          %1295 = vmatpush.bf16.msra.mxu0 %v1280
          %1296 = vmatpush.bf16.msra.mxu0 %v1279
          %1297 = vmatpush.bf16.msra.mxu0 %v1278
          %1298 = vmatpush.bf16.msra.mxu0 %v1277
          %1299 = vmatpush.bf16.msra.mxu0 %v1276
          %1300 = vmatmul.bf16.gmra.mxu0 %v678
          %v1301 = vpop.f32.mrf.mxu0
          %v1302 = vadd.f32 %v918, %v1301
          %v1303 = vpop.f32.mrf.mxu0
          %1304 = vdwg.mxu0
          %v1321 = vunpack.c.l.b16 %v775
          %v1322 = vunpack.c.l.b16 %v776
          %v1323 = vunpack.c.l.b16 %v777
          %v1324 = vunpack.c.l.b16 %v778
          %v1325 = vunpack.c.l.b16 %v779
          %v1326 = vunpack.c.l.b16 %v780
          %v1327 = vunpack.c.l.b16 %v781
          %v1328 = vunpack.c.l.b16 %v782
          %v1329 = vunpack.c.l.b16 %v783
          %v1330 = vunpack.c.l.b16 %v784
          %v1331 = vunpack.c.l.b16 %v785
          %v1332 = vunpack.c.l.b16 %v786
          %v1333 = vunpack.c.l.b16 %v787
          %v1334 = vunpack.c.l.b16 %v788
          %v1335 = vunpack.c.l.b16 %v789
          %v1336 = vunpack.c.l.b16 %v790
          %v1337 = vpack.c.b16 %v1322, %v1321
          %v1338 = vpack.c.b16 %v1324, %v1323
          %v1339 = vpack.c.b16 %v1326, %v1325
          %v1340 = vpack.c.b16 %v1328, %v1327
          %v1341 = vpack.c.b16 %v1330, %v1329
          %v1342 = vpack.c.b16 %v1332, %v1331
          %v1343 = vpack.c.b16 %v1334, %v1333
          %v1344 = vpack.c.b16 %v1336, %v1335
          %1353 = vmatpush.bf16.msra.mxu0 %v1344
          %1354 = vmatpush.bf16.msra.mxu0 %v1343
          %1355 = vmatpush.bf16.msra.mxu0 %v1342
          %1356 = vmatpush.bf16.msra.mxu0 %v1341
          %1357 = vmatpush.bf16.msra.mxu0 %v1340
          %1358 = vmatpush.bf16.msra.mxu0 %v1339
          %1359 = vmatpush.bf16.msra.mxu0 %v1338
          %1360 = vmatpush.bf16.msra.mxu0 %v1337
          %1361 = vmatmul.bf16.gmra.mxu0 %v678
          %v1362 = vpop.f32.mrf.mxu0
          %v1363 = vadd.f32 %v919, %v1362
          %v1364 = vpop.f32.mrf.mxu0
          %1365 = vdwg.mxu0
          %v1382 = vunpack.c.l.b16 %v791
          %v1383 = vunpack.c.l.b16 %v792
          %v1384 = vunpack.c.l.b16 %v793
          %v1385 = vunpack.c.l.b16 %v794
          %v1386 = vunpack.c.l.b16 %v795
          %v1387 = vunpack.c.l.b16 %v796
          %v1388 = vunpack.c.l.b16 %v797
          %v1389 = vunpack.c.l.b16 %v798
          %v1390 = vunpack.c.l.b16 %v799
          %v1391 = vunpack.c.l.b16 %v800
          %v1392 = vunpack.c.l.b16 %v801
          %v1393 = vunpack.c.l.b16 %v802
          %v1394 = vunpack.c.l.b16 %v803
          %v1395 = vunpack.c.l.b16 %v804
          %v1396 = vunpack.c.l.b16 %v805
          %v1397 = vunpack.c.l.b16 %v806
          %v1398 = vpack.c.b16 %v1383, %v1382
          %v1399 = vpack.c.b16 %v1385, %v1384
          %v1400 = vpack.c.b16 %v1387, %v1386
          %v1401 = vpack.c.b16 %v1389, %v1388
          %v1402 = vpack.c.b16 %v1391, %v1390
          %v1403 = vpack.c.b16 %v1393, %v1392
          %v1404 = vpack.c.b16 %v1395, %v1394
          %v1405 = vpack.c.b16 %v1397, %v1396
          %1414 = vmatpush.bf16.msra.mxu0 %v1405
          %1415 = vmatpush.bf16.msra.mxu0 %v1404
          %1416 = vmatpush.bf16.msra.mxu0 %v1403
          %1417 = vmatpush.bf16.msra.mxu0 %v1402
          %1418 = vmatpush.bf16.msra.mxu0 %v1401
          %1419 = vmatpush.bf16.msra.mxu0 %v1400
          %1420 = vmatpush.bf16.msra.mxu0 %v1399
          %1421 = vmatpush.bf16.msra.mxu0 %v1398
          %1422 = vmatmul.bf16.gmra.mxu0 %v678
          %v1423 = vpop.f32.mrf.mxu0
          %v1424 = vadd.f32 %v920, %v1423
          %v1425 = vpop.f32.mrf.mxu0
          %1426 = vdwg.mxu0
          %v1443 = vunpack.c.l.b16 %v807
          %v1444 = vunpack.c.l.b16 %v808
          %v1445 = vunpack.c.l.b16 %v809
          %v1446 = vunpack.c.l.b16 %v810
          %v1447 = vunpack.c.l.b16 %v811
          %v1448 = vunpack.c.l.b16 %v812
          %v1449 = vunpack.c.l.b16 %v813
          %v1450 = vunpack.c.l.b16 %v814
          %v1451 = vunpack.c.l.b16 %v815
          %v1452 = vunpack.c.l.b16 %v816
          %v1453 = vunpack.c.l.b16 %v817
          %v1454 = vunpack.c.l.b16 %v818
          %v1455 = vunpack.c.l.b16 %v819
          %v1456 = vunpack.c.l.b16 %v820
          %v1457 = vunpack.c.l.b16 %v821
          %v1458 = vunpack.c.l.b16 %v822
          %v1459 = vpack.c.b16 %v1444, %v1443
          %v1460 = vpack.c.b16 %v1446, %v1445
          %v1461 = vpack.c.b16 %v1448, %v1447
          %v1462 = vpack.c.b16 %v1450, %v1449
          %v1463 = vpack.c.b16 %v1452, %v1451
          %v1464 = vpack.c.b16 %v1454, %v1453
          %v1465 = vpack.c.b16 %v1456, %v1455
          %v1466 = vpack.c.b16 %v1458, %v1457
          %1475 = vmatpush.bf16.msra.mxu0 %v1466
          %1476 = vmatpush.bf16.msra.mxu0 %v1465
          %1477 = vmatpush.bf16.msra.mxu0 %v1464
          %1478 = vmatpush.bf16.msra.mxu0 %v1463
          %1479 = vmatpush.bf16.msra.mxu0 %v1462
          %1480 = vmatpush.bf16.msra.mxu0 %v1461
          %1481 = vmatpush.bf16.msra.mxu0 %v1460
          %1482 = vmatpush.bf16.msra.mxu0 %v1459
          %1483 = vmatmul.bf16.gmra.mxu0 %v678
          %v1484 = vpop.f32.mrf.mxu0
          %v1485 = vadd.f32 %v921, %v1484
          %v1486 = vpop.f32.mrf.mxu0
          %1487 = vdwg.mxu0
          %v1504 = vunpack.c.l.b16 %v823
          %v1505 = vunpack.c.l.b16 %v824
          %v1506 = vunpack.c.l.b16 %v825
          %v1507 = vunpack.c.l.b16 %v826
          %v1508 = vunpack.c.l.b16 %v827
          %v1509 = vunpack.c.l.b16 %v828
          %v1510 = vunpack.c.l.b16 %v829
          %v1511 = vunpack.c.l.b16 %v830
          %v1512 = vunpack.c.l.b16 %v831
          %v1513 = vunpack.c.l.b16 %v832
          %v1514 = vunpack.c.l.b16 %v833
          %v1515 = vunpack.c.l.b16 %v834
          %v1516 = vunpack.c.l.b16 %v835
          %v1517 = vunpack.c.l.b16 %v836
          %v1518 = vunpack.c.l.b16 %v837
          %v1519 = vunpack.c.l.b16 %v838
          %v1520 = vpack.c.b16 %v1505, %v1504
          %v1521 = vpack.c.b16 %v1507, %v1506
          %v1522 = vpack.c.b16 %v1509, %v1508
          %v1523 = vpack.c.b16 %v1511, %v1510
          %v1524 = vpack.c.b16 %v1513, %v1512
          %v1525 = vpack.c.b16 %v1515, %v1514
          %v1526 = vpack.c.b16 %v1517, %v1516
          %v1527 = vpack.c.b16 %v1519, %v1518
          %1536 = vmatpush.bf16.msra.mxu0 %v1527
          %1537 = vmatpush.bf16.msra.mxu0 %v1526
          %1538 = vmatpush.bf16.msra.mxu0 %v1525
          %1539 = vmatpush.bf16.msra.mxu0 %v1524
          %1540 = vmatpush.bf16.msra.mxu0 %v1523
          %1541 = vmatpush.bf16.msra.mxu0 %v1522
          %1542 = vmatpush.bf16.msra.mxu0 %v1521
          %1543 = vmatpush.bf16.msra.mxu0 %v1520
          %1544 = vmatmul.bf16.gmra.mxu0 %v678
          %v1545 = vpop.f32.mrf.mxu0
          %v1546 = vadd.f32 %v922, %v1545
          %v1547 = vpop.f32.mrf.mxu0
          %1548 = vdwg.mxu0
          %v1565 = vunpack.c.l.b16 %v839
          %v1566 = vunpack.c.l.b16 %v840
          %v1567 = vunpack.c.l.b16 %v841
          %v1568 = vunpack.c.l.b16 %v842
          %v1569 = vunpack.c.l.b16 %v843
          %v1570 = vunpack.c.l.b16 %v844
          %v1571 = vunpack.c.l.b16 %v845
          %v1572 = vunpack.c.l.b16 %v846
          %v1573 = vunpack.c.l.b16 %v847
          %v1574 = vunpack.c.l.b16 %v848
          %v1575 = vunpack.c.l.b16 %v849
          %v1576 = vunpack.c.l.b16 %v850
          %v1577 = vunpack.c.l.b16 %v851
          %v1578 = vunpack.c.l.b16 %v852
          %v1579 = vunpack.c.l.b16 %v853
          %v1580 = vunpack.c.l.b16 %v854
          %v1581 = vpack.c.b16 %v1566, %v1565
          %v1582 = vpack.c.b16 %v1568, %v1567
          %v1583 = vpack.c.b16 %v1570, %v1569
          %v1584 = vpack.c.b16 %v1572, %v1571
          %v1585 = vpack.c.b16 %v1574, %v1573
          %v1586 = vpack.c.b16 %v1576, %v1575
          %v1587 = vpack.c.b16 %v1578, %v1577
          %v1588 = vpack.c.b16 %v1580, %v1579
          %1597 = vmatpush.bf16.msra.mxu0 %v1588
          %1598 = vmatpush.bf16.msra.mxu0 %v1587
          %1599 = vmatpush.bf16.msra.mxu0 %v1586
          %1600 = vmatpush.bf16.msra.mxu0 %v1585
          %1601 = vmatpush.bf16.msra.mxu0 %v1584
          %1602 = vmatpush.bf16.msra.mxu0 %v1583
          %1603 = vmatpush.bf16.msra.mxu0 %v1582
          %1604 = vmatpush.bf16.msra.mxu0 %v1581
          %1605 = vmatmul.bf16.gmra.mxu0 %v678
          %v1606 = vpop.f32.mrf.mxu0
          %v1607 = vadd.f32 %v923, %v1606
          %v1608 = vpop.f32.mrf.mxu0
          %1609 = vdwg.mxu0
          %v1626 = vunpack.c.l.b16 %v855
          %v1627 = vunpack.c.l.b16 %v856
          %v1628 = vunpack.c.l.b16 %v857
          %v1629 = vunpack.c.l.b16 %v858
          %v1630 = vunpack.c.l.b16 %v859
          %v1631 = vunpack.c.l.b16 %v860
          %v1632 = vunpack.c.l.b16 %v861
          %v1633 = vunpack.c.l.b16 %v862
          %v1634 = vunpack.c.l.b16 %v863
          %v1635 = vunpack.c.l.b16 %v864
          %v1636 = vunpack.c.l.b16 %v865
          %v1637 = vunpack.c.l.b16 %v866
          %v1638 = vunpack.c.l.b16 %v867
          %v1639 = vunpack.c.l.b16 %v868
          %v1640 = vunpack.c.l.b16 %v869
          %v1641 = vunpack.c.l.b16 %v870
          %v1642 = vpack.c.b16 %v1627, %v1626
          %v1643 = vpack.c.b16 %v1629, %v1628
          %v1644 = vpack.c.b16 %v1631, %v1630
          %v1645 = vpack.c.b16 %v1633, %v1632
          %v1646 = vpack.c.b16 %v1635, %v1634
          %v1647 = vpack.c.b16 %v1637, %v1636
          %v1648 = vpack.c.b16 %v1639, %v1638
          %v1649 = vpack.c.b16 %v1641, %v1640
          %1658 = vmatpush.bf16.msra.mxu0 %v1649
          %1659 = vmatpush.bf16.msra.mxu0 %v1648
          %1660 = vmatpush.bf16.msra.mxu0 %v1647
          %1661 = vmatpush.bf16.msra.mxu0 %v1646
          %1662 = vmatpush.bf16.msra.mxu0 %v1645
          %1663 = vmatpush.bf16.msra.mxu0 %v1644
          %1664 = vmatpush.bf16.msra.mxu0 %v1643
          %1665 = vmatpush.bf16.msra.mxu0 %v1642
          %1666 = vmatmul.bf16.gmra.mxu0 %v678
          %v1667 = vpop.f32.mrf.mxu0
          %v1668 = vadd.f32 %v924, %v1667
          %v1669 = vpop.f32.mrf.mxu0
          %1670 = vdwg.mxu0
          %v1687 = vunpack.c.l.b16 %v871
          %v1688 = vunpack.c.l.b16 %v872
          %v1689 = vunpack.c.l.b16 %v873
          %v1690 = vunpack.c.l.b16 %v874
          %v1691 = vunpack.c.l.b16 %v875
          %v1692 = vunpack.c.l.b16 %v876
          %v1693 = vunpack.c.l.b16 %v877
          %v1694 = vunpack.c.l.b16 %v878
          %v1695 = vunpack.c.l.b16 %v879
          %v1696 = vunpack.c.l.b16 %v880
          %v1697 = vunpack.c.l.b16 %v881
          %v1698 = vunpack.c.l.b16 %v882
          %v1699 = vunpack.c.l.b16 %v883
          %v1700 = vunpack.c.l.b16 %v884
          %v1701 = vunpack.c.l.b16 %v885
          %v1702 = vunpack.c.l.b16 %v886
          %v1703 = vpack.c.b16 %v1688, %v1687
          %v1704 = vpack.c.b16 %v1690, %v1689
          %v1705 = vpack.c.b16 %v1692, %v1691
          %v1706 = vpack.c.b16 %v1694, %v1693
          %v1707 = vpack.c.b16 %v1696, %v1695
          %v1708 = vpack.c.b16 %v1698, %v1697
          %v1709 = vpack.c.b16 %v1700, %v1699
          %v1710 = vpack.c.b16 %v1702, %v1701
          %1719 = vmatpush.bf16.msra.mxu0 %v1710
          %1720 = vmatpush.bf16.msra.mxu0 %v1709
          %1721 = vmatpush.bf16.msra.mxu0 %v1708
          %1722 = vmatpush.bf16.msra.mxu0 %v1707
          %1723 = vmatpush.bf16.msra.mxu0 %v1706
          %1724 = vmatpush.bf16.msra.mxu0 %v1705
          %1725 = vmatpush.bf16.msra.mxu0 %v1704
          %1726 = vmatpush.bf16.msra.mxu0 %v1703
          %1727 = vmatmul.bf16.gmra.mxu0 %v678
          %v1728 = vpop.f32.mrf.mxu0
          %v1729 = vadd.f32 %v925, %v1728
          %v1730 = vpop.f32.mrf.mxu0
          %1731 = vdwg.mxu0
          %v1732 = vmul.f32 %v997, %v997
          %v1733 = vmul.f32 %v1058, %v1058
          %v1734 = vmul.f32 %v1119, %v1119
          %v1735 = vmul.f32 %v1180, %v1180
          %v1736 = vmul.f32 %v1241, %v1241
          %v1737 = vmul.f32 %v1302, %v1302
          %v1738 = vmul.f32 %v1363, %v1363
          %v1739 = vmul.f32 %v1424, %v1424
          %v1740 = vmul.f32 %v1485, %v1485
          %v1741 = vmul.f32 %v1546, %v1546
          %v1742 = vmul.f32 %v1607, %v1607
          %v1743 = vmul.f32 %v1668, %v1668
          %v1744 = vmul.f32 %v1729, %v1729
          %1745 = vadd.xlane.f32.xlu0 %v1732
          %v1746 = vpop.xlane.xlu0 %1745
          %1747 = vadd.xlane.f32.xlu0 %v1733
          %v1748 = vpop.xlane.xlu0 %1747
          %1749 = vadd.xlane.f32.xlu0 %v1734
          %v1750 = vpop.xlane.xlu0 %1749
          %1751 = vadd.xlane.f32.xlu0 %v1735
          %v1752 = vpop.xlane.xlu0 %1751
          %1753 = vadd.xlane.f32.xlu0 %v1736
          %v1754 = vpop.xlane.xlu0 %1753
          %1755 = vadd.xlane.f32.xlu0 %v1737
          %v1756 = vpop.xlane.xlu0 %1755
          %1757 = vadd.xlane.f32.xlu0 %v1738
          %v1758 = vpop.xlane.xlu0 %1757
          %1759 = vadd.xlane.f32.xlu0 %v1739
          %v1760 = vpop.xlane.xlu0 %1759
          %1761 = vadd.xlane.f32.xlu0 %v1740
          %v1762 = vpop.xlane.xlu0 %1761
          %1763 = vadd.xlane.f32.xlu0 %v1741
          %v1764 = vpop.xlane.xlu0 %1763
          %1765 = vadd.xlane.f32.xlu0 %v1742
          %v1766 = vpop.xlane.xlu0 %1765
          %1767 = vadd.xlane.f32.xlu0 %v1743
          %v1768 = vpop.xlane.xlu0 %1767
          %1769 = vadd.xlane.f32.xlu0 %v1744
          %v1770 = vpop.xlane.xlu0 %1769
          %v1771 = vadd.f32 %v1746, %v1748
          %v1772 = vadd.f32 %v1771, %v1750
          %v1773 = vadd.f32 %v1772, %v1752
          %v1774 = vadd.f32 %v1773, %v1754
          %v1775 = vadd.f32 %v1774, %v1756
          %v1776 = vadd.f32 %v1775, %v1758
          %v1777 = vadd.f32 %v1776, %v1760
          %v1778 = vadd.f32 %v1777, %v1762
          %v1779 = vadd.f32 %v1778, %v1764
          %v1780 = vadd.f32 %v1779, %v1766
          %v1781 = vadd.f32 %v1780, %v1768
          %v1782 = vadd.f32 %v1781, %v1770
          %v1783 = vmax.f32 %v1782, 1e-12
          %v1784 = vrsqrt.pop %v1783
          %v1785 = vmul.f32 %v1784, %v1783
          %v1786 = vmul.f32 %v1785, %v1784
          %v1787 = vmul.f32 0.5, %v1786
          %v1788 = vsub.f32 1.5, %v1787
          %v1789 = vmul.f32 %v1784, %v1788
          %vm1790 = vweird.f32 %v1783
          %vm1791 = vweird.f32 %v1784
          %vm1792 = vmor %vm1790, %vm1791
          %v1793 = vsel %vm1792, %v1784, %v1789
          %v1794 = vmul.f32 %v997, %v1793
          %v1795 = vmul.f32 %v1058, %v1793
          %v1796 = vmul.f32 %v1119, %v1793
          %v1797 = vmul.f32 %v1180, %v1793
          %v1798 = vmul.f32 %v1241, %v1793
          %v1799 = vmul.f32 %v1302, %v1793
          %v1800 = vmul.f32 %v1363, %v1793
          %v1801 = vmul.f32 %v1424, %v1793
          %v1802 = vmul.f32 %v1485, %v1793
          %v1803 = vmul.f32 %v1546, %v1793
          %v1804 = vmul.f32 %v1607, %v1793
          %v1805 = vmul.f32 %v1668, %v1793
          %v1806 = vmul.f32 %v1729, %v1793
          %v1807 = vpack.c.bf16 %v1794, %v1794
          %v1808 = vpack.c.bf16 %v1795, %v1795
          %v1809 = vpack.c.bf16 %v1796, %v1796
          %v1810 = vpack.c.bf16 %v1797, %v1797
          %v1811 = vpack.c.bf16 %v1798, %v1798
          %v1812 = vpack.c.bf16 %v1799, %v1799
          %v1813 = vpack.c.bf16 %v1800, %v1800
          %v1814 = vpack.c.bf16 %v1801, %v1801
          %v1815 = vpack.c.bf16 %v1802, %v1802
          %v1816 = vpack.c.bf16 %v1803, %v1803
          %v1817 = vpack.c.bf16 %v1804, %v1804
          %v1818 = vpack.c.bf16 %v1805, %v1805
          %v1819 = vpack.c.bf16 %v1806, %v1806
          %1820 = vmatpush.bf16.xpose.msra.mxu0 0
          %1821 = vmatpush.bf16.xpose.msra.mxu0 0
          %1822 = vmatpush.bf16.xpose.msra.mxu0 0
          %1823 = vmatpush.bf16.xpose.msra.mxu0 0
          %1824 = vmatpush.bf16.xpose.msra.mxu0 0
          %1825 = vmatpush.bf16.xpose.msra.mxu0 0
          %1826 = vmatpush.bf16.xpose.msra.mxu0 0
          %1827 = vmatpush.bf16.xpose.msra.mxu0 %v1807
          %1828 = vmatmul.bf16.gmra.mxu0 %v1807
          %v1829 = vpop.f32.mrf.mxu0
          %v1830 = vadd.f32 0.0, %v1829
          %v1831 = vpop.f32.mrf.mxu0
          %1832 = vdwg.mxu0
          %1833 = vmatpush.bf16.xpose.msra.mxu0 0
          %1834 = vmatpush.bf16.xpose.msra.mxu0 0
          %1835 = vmatpush.bf16.xpose.msra.mxu0 0
          %1836 = vmatpush.bf16.xpose.msra.mxu0 0
          %1837 = vmatpush.bf16.xpose.msra.mxu0 0
          %1838 = vmatpush.bf16.xpose.msra.mxu0 0
          %1839 = vmatpush.bf16.xpose.msra.mxu0 0
          %1840 = vmatpush.bf16.xpose.msra.mxu0 %v1808
          %1841 = vmatmul.bf16.gmra.mxu0 %v1808
          %v1842 = vpop.f32.mrf.mxu0
          %v1843 = vadd.f32 0.0, %v1842
          %v1844 = vpop.f32.mrf.mxu0
          %1845 = vdwg.mxu0
          %1846 = vmatpush.bf16.xpose.msra.mxu0 0
          %1847 = vmatpush.bf16.xpose.msra.mxu0 0
          %1848 = vmatpush.bf16.xpose.msra.mxu0 0
          %1849 = vmatpush.bf16.xpose.msra.mxu0 0
          %1850 = vmatpush.bf16.xpose.msra.mxu0 0
          %1851 = vmatpush.bf16.xpose.msra.mxu0 0
          %1852 = vmatpush.bf16.xpose.msra.mxu0 0
          %1853 = vmatpush.bf16.xpose.msra.mxu0 %v1809
          %1854 = vmatmul.bf16.gmra.mxu0 %v1809
          %v1855 = vpop.f32.mrf.mxu0
          %v1856 = vadd.f32 0.0, %v1855
          %v1857 = vpop.f32.mrf.mxu0
          %1858 = vdwg.mxu0
          %1859 = vmatpush.bf16.xpose.msra.mxu0 0
          %1860 = vmatpush.bf16.xpose.msra.mxu0 0
          %1861 = vmatpush.bf16.xpose.msra.mxu0 0
          %1862 = vmatpush.bf16.xpose.msra.mxu0 0
          %1863 = vmatpush.bf16.xpose.msra.mxu0 0
          %1864 = vmatpush.bf16.xpose.msra.mxu0 0
          %1865 = vmatpush.bf16.xpose.msra.mxu0 0
          %1866 = vmatpush.bf16.xpose.msra.mxu0 %v1810
          %1867 = vmatmul.bf16.gmra.mxu0 %v1810
          %v1868 = vpop.f32.mrf.mxu0
          %v1869 = vadd.f32 0.0, %v1868
          %v1870 = vpop.f32.mrf.mxu0
          %1871 = vdwg.mxu0
          %1872 = vmatpush.bf16.xpose.msra.mxu0 0
          %1873 = vmatpush.bf16.xpose.msra.mxu0 0
          %1874 = vmatpush.bf16.xpose.msra.mxu0 0
          %1875 = vmatpush.bf16.xpose.msra.mxu0 0
          %1876 = vmatpush.bf16.xpose.msra.mxu0 0
          %1877 = vmatpush.bf16.xpose.msra.mxu0 0
          %1878 = vmatpush.bf16.xpose.msra.mxu0 0
          %1879 = vmatpush.bf16.xpose.msra.mxu0 %v1811
          %1880 = vmatmul.bf16.gmra.mxu0 %v1811
          %v1881 = vpop.f32.mrf.mxu0
          %v1882 = vadd.f32 0.0, %v1881
          %v1883 = vpop.f32.mrf.mxu0
          %1884 = vdwg.mxu0
          %1885 = vmatpush.bf16.xpose.msra.mxu0 0
          %1886 = vmatpush.bf16.xpose.msra.mxu0 0
          %1887 = vmatpush.bf16.xpose.msra.mxu0 0
          %1888 = vmatpush.bf16.xpose.msra.mxu0 0
          %1889 = vmatpush.bf16.xpose.msra.mxu0 0
          %1890 = vmatpush.bf16.xpose.msra.mxu0 0
          %1891 = vmatpush.bf16.xpose.msra.mxu0 0
          %1892 = vmatpush.bf16.xpose.msra.mxu0 %v1812
          %1893 = vmatmul.bf16.gmra.mxu0 %v1812
          %v1894 = vpop.f32.mrf.mxu0
          %v1895 = vadd.f32 0.0, %v1894
          %v1896 = vpop.f32.mrf.mxu0
          %1897 = vdwg.mxu0
          %1898 = vmatpush.bf16.xpose.msra.mxu0 0
          %1899 = vmatpush.bf16.xpose.msra.mxu0 0
          %1900 = vmatpush.bf16.xpose.msra.mxu0 0
          %1901 = vmatpush.bf16.xpose.msra.mxu0 0
          %1902 = vmatpush.bf16.xpose.msra.mxu0 0
          %1903 = vmatpush.bf16.xpose.msra.mxu0 0
          %1904 = vmatpush.bf16.xpose.msra.mxu0 0
          %1905 = vmatpush.bf16.xpose.msra.mxu0 %v1813
          %1906 = vmatmul.bf16.gmra.mxu0 %v1813
          %v1907 = vpop.f32.mrf.mxu0
          %v1908 = vadd.f32 0.0, %v1907
          %v1909 = vpop.f32.mrf.mxu0
          %1910 = vdwg.mxu0
          %1911 = vmatpush.bf16.xpose.msra.mxu0 0
          %1912 = vmatpush.bf16.xpose.msra.mxu0 0
          %1913 = vmatpush.bf16.xpose.msra.mxu0 0
          %1914 = vmatpush.bf16.xpose.msra.mxu0 0
          %1915 = vmatpush.bf16.xpose.msra.mxu0 0
          %1916 = vmatpush.bf16.xpose.msra.mxu0 0
          %1917 = vmatpush.bf16.xpose.msra.mxu0 0
          %1918 = vmatpush.bf16.xpose.msra.mxu0 %v1814
          %1919 = vmatmul.bf16.gmra.mxu0 %v1814
          %v1920 = vpop.f32.mrf.mxu0
          %v1921 = vadd.f32 0.0, %v1920
          %v1922 = vpop.f32.mrf.mxu0
          %1923 = vdwg.mxu0
          %1924 = vmatpush.bf16.xpose.msra.mxu0 0
          %1925 = vmatpush.bf16.xpose.msra.mxu0 0
          %1926 = vmatpush.bf16.xpose.msra.mxu0 0
          %1927 = vmatpush.bf16.xpose.msra.mxu0 0
          %1928 = vmatpush.bf16.xpose.msra.mxu0 0
          %1929 = vmatpush.bf16.xpose.msra.mxu0 0
          %1930 = vmatpush.bf16.xpose.msra.mxu0 0
          %1931 = vmatpush.bf16.xpose.msra.mxu0 %v1815
          %1932 = vmatmul.bf16.gmra.mxu0 %v1815
          %v1933 = vpop.f32.mrf.mxu0
          %v1934 = vadd.f32 0.0, %v1933
          %v1935 = vpop.f32.mrf.mxu0
          %1936 = vdwg.mxu0
          %1937 = vmatpush.bf16.xpose.msra.mxu0 0
          %1938 = vmatpush.bf16.xpose.msra.mxu0 0
          %1939 = vmatpush.bf16.xpose.msra.mxu0 0
          %1940 = vmatpush.bf16.xpose.msra.mxu0 0
          %1941 = vmatpush.bf16.xpose.msra.mxu0 0
          %1942 = vmatpush.bf16.xpose.msra.mxu0 0
          %1943 = vmatpush.bf16.xpose.msra.mxu0 0
          %1944 = vmatpush.bf16.xpose.msra.mxu0 %v1816
          %1945 = vmatmul.bf16.gmra.mxu0 %v1816
          %v1946 = vpop.f32.mrf.mxu0
          %v1947 = vadd.f32 0.0, %v1946
          %v1948 = vpop.f32.mrf.mxu0
          %1949 = vdwg.mxu0
          %1950 = vmatpush.bf16.xpose.msra.mxu0 0
          %1951 = vmatpush.bf16.xpose.msra.mxu0 0
          %1952 = vmatpush.bf16.xpose.msra.mxu0 0
          %1953 = vmatpush.bf16.xpose.msra.mxu0 0
          %1954 = vmatpush.bf16.xpose.msra.mxu0 0
          %1955 = vmatpush.bf16.xpose.msra.mxu0 0
          %1956 = vmatpush.bf16.xpose.msra.mxu0 0
          %1957 = vmatpush.bf16.xpose.msra.mxu0 %v1817
          %1958 = vmatmul.bf16.gmra.mxu0 %v1817
          %v1959 = vpop.f32.mrf.mxu0
          %v1960 = vadd.f32 0.0, %v1959
          %v1961 = vpop.f32.mrf.mxu0
          %1962 = vdwg.mxu0
          %1963 = vmatpush.bf16.xpose.msra.mxu0 0
          %1964 = vmatpush.bf16.xpose.msra.mxu0 0
          %1965 = vmatpush.bf16.xpose.msra.mxu0 0
          %1966 = vmatpush.bf16.xpose.msra.mxu0 0
          %1967 = vmatpush.bf16.xpose.msra.mxu0 0
          %1968 = vmatpush.bf16.xpose.msra.mxu0 0
          %1969 = vmatpush.bf16.xpose.msra.mxu0 0
          %1970 = vmatpush.bf16.xpose.msra.mxu0 %v1818
          %1971 = vmatmul.bf16.gmra.mxu0 %v1818
          %v1972 = vpop.f32.mrf.mxu0
          %v1973 = vadd.f32 0.0, %v1972
          %v1974 = vpop.f32.mrf.mxu0
          %1975 = vdwg.mxu0
          %1976 = vmatpush.bf16.xpose.msra.mxu0 0
          %1977 = vmatpush.bf16.xpose.msra.mxu0 0
          %1978 = vmatpush.bf16.xpose.msra.mxu0 0
          %1979 = vmatpush.bf16.xpose.msra.mxu0 0
          %1980 = vmatpush.bf16.xpose.msra.mxu0 0
          %1981 = vmatpush.bf16.xpose.msra.mxu0 0
          %1982 = vmatpush.bf16.xpose.msra.mxu0 0
          %1983 = vmatpush.bf16.xpose.msra.mxu0 %v1819
          %1984 = vmatmul.bf16.gmra.mxu0 %v1819
          %v1985 = vpop.f32.mrf.mxu0
          %v1986 = vadd.f32 0.0, %v1985
          %v1987 = vpop.f32.mrf.mxu0
          %1988 = vdwg.mxu0
          %vm1989 = vcmask 64512
          %v1990 = vsel %vm1989, %v1830, 0.0
          %v1991 = vsel %vm1989, %v1843, 0.0
          %v1992 = vadd.f32 %v1990, %v1991
          %v1993 = vsel %vm1989, %v1856, 0.0
          %v1994 = vadd.f32 %v1992, %v1993
          %v1995 = vsel %vm1989, %v1869, 0.0
          %v1996 = vadd.f32 %v1994, %v1995
          %v1997 = vsel %vm1989, %v1882, 0.0
          %v1998 = vadd.f32 %v1996, %v1997
          %v1999 = vsel %vm1989, %v1895, 0.0
          %v2000 = vadd.f32 %v1998, %v1999
          %v2001 = vsel %vm1989, %v1908, 0.0
          %v2002 = vadd.f32 %v2000, %v2001
          %v2003 = vsel %vm1989, %v1921, 0.0
          %v2004 = vadd.f32 %v2002, %v2003
          %v2005 = vsel %vm1989, %v1934, 0.0
          %v2006 = vadd.f32 %v2004, %v2005
          %v2007 = vsel %vm1989, %v1947, 0.0
          %v2008 = vadd.f32 %v2006, %v2007
          %v2009 = vsel %vm1989, %v1960, 0.0
          %v2010 = vadd.f32 %v2008, %v2009
          %v2011 = vsel %vm1989, %v1973, 0.0
          %v2012 = vadd.f32 %v2010, %v2011
          %v2013 = vsel %vm1989, %v1986, 0.0
          %v2014 = vadd.f32 %v2012, %v2013
          %2015 = vst.msk [vmem:[#allocation11] sm:$0xff] %vm1989, %v2014
          %v2016 = vlaneseq
          %v2017 = vand.u32 %v2016, 127
          %vm2018 = vcmp.lt.s32.totalorder %v2017, 10
          %v2019 = vsel %vm2018, %v997, -1e+09
          %v2020 = vsel %vm2018, %v1058, -1e+09
          %v2021 = vsel %vm2018, %v1119, -1e+09
          %v2022 = vsel %vm2018, %v1180, -1e+09
          %v2023 = vsel %vm2018, %v1241, -1e+09
          %v2024 = vsel %vm2018, %v1302, -1e+09
          %v2025 = vsel %vm2018, %v1363, -1e+09
          %v2026 = vsel %vm2018, %v1424, -1e+09
          %v2027 = vsel %vm2018, %v1485, -1e+09
          %v2028 = vsel %vm2018, %v1546, -1e+09
          %v2029 = vsel %vm2018, %v1607, -1e+09
          %v2030 = vsel %vm2018, %v1668, -1e+09
          %v2031 = vsel %vm2018, %v1729, -1e+09
          %2032 = vmax.xlane.f32.xlu0 %v2019
          %v2033 = vpop.xlane.xlu0 %2032
          %2034 = vmax.xlane.f32.xlu0 %v2020
          %v2035 = vpop.xlane.xlu0 %2034
          %2036 = vmax.xlane.f32.xlu0 %v2021
          %v2037 = vpop.xlane.xlu0 %2036
          %2038 = vmax.xlane.f32.xlu0 %v2022
          %v2039 = vpop.xlane.xlu0 %2038
          %2040 = vmax.xlane.f32.xlu0 %v2023
          %v2041 = vpop.xlane.xlu0 %2040
          %2042 = vmax.xlane.f32.xlu0 %v2024
          %v2043 = vpop.xlane.xlu0 %2042
          %2044 = vmax.xlane.f32.xlu0 %v2025
          %v2045 = vpop.xlane.xlu0 %2044
          %2046 = vmax.xlane.f32.xlu0 %v2026
          %v2047 = vpop.xlane.xlu0 %2046
          %2048 = vmax.xlane.f32.xlu0 %v2027
          %v2049 = vpop.xlane.xlu0 %2048
          %2050 = vmax.xlane.f32.xlu0 %v2028
          %v2051 = vpop.xlane.xlu0 %2050
          %2052 = vmax.xlane.f32.xlu0 %v2029
          %v2053 = vpop.xlane.xlu0 %2052
          %2054 = vmax.xlane.f32.xlu0 %v2030
          %v2055 = vpop.xlane.xlu0 %2054
          %2056 = vmax.xlane.f32.xlu0 %v2031
          %v2057 = vpop.xlane.xlu0 %2056
          %v2058 = vsub.f32 %v2019, %v2033
          %v2059 = vsub.f32 %v2020, %v2035
          %v2060 = vsub.f32 %v2021, %v2037
          %v2061 = vsub.f32 %v2022, %v2039
          %v2062 = vsub.f32 %v2023, %v2041
          %v2063 = vsub.f32 %v2024, %v2043
          %v2064 = vsub.f32 %v2025, %v2045
          %v2065 = vsub.f32 %v2026, %v2047
          %v2066 = vsub.f32 %v2027, %v2049
          %v2067 = vsub.f32 %v2028, %v2051
          %v2068 = vsub.f32 %v2029, %v2053
          %v2069 = vsub.f32 %v2030, %v2055
          %v2070 = vsub.f32 %v2031, %v2057
          %v2071 = vmul.f32 %v2058, 1.442695
          %v2072 = vpow.pop %v2071
          %v2073 = vmul.f32 %v2059, 1.442695
          %v2074 = vpow.pop %v2073
          %v2075 = vmul.f32 %v2060, 1.442695
          %v2076 = vpow.pop %v2075
          %v2077 = vmul.f32 %v2061, 1.442695
          %v2078 = vpow.pop %v2077
          %v2079 = vmul.f32 %v2062, 1.442695
          %v2080 = vpow.pop %v2079
          %v2081 = vmul.f32 %v2063, 1.442695
          %v2082 = vpow.pop %v2081
          %v2083 = vmul.f32 %v2064, 1.442695
          %v2084 = vpow.pop %v2083
          %v2085 = vmul.f32 %v2065, 1.442695
          %v2086 = vpow.pop %v2085
          %v2087 = vmul.f32 %v2066, 1.442695
          %v2088 = vpow.pop %v2087
          %v2089 = vmul.f32 %v2067, 1.442695
          %v2090 = vpow.pop %v2089
          %v2091 = vmul.f32 %v2068, 1.442695
          %v2092 = vpow.pop %v2091
          %v2093 = vmul.f32 %v2069, 1.442695
          %v2094 = vpow.pop %v2093
          %v2095 = vmul.f32 %v2070, 1.442695
          %v2096 = vpow.pop %v2095
          %2097 = vadd.xlane.f32.xlu0 %v2072
          %v2098 = vpop.xlane.xlu0 %2097
          %2099 = vadd.xlane.f32.xlu0 %v2074
          %v2100 = vpop.xlane.xlu0 %2099
          %2101 = vadd.xlane.f32.xlu0 %v2076
          %v2102 = vpop.xlane.xlu0 %2101
          %2103 = vadd.xlane.f32.xlu0 %v2078
          %v2104 = vpop.xlane.xlu0 %2103
          %2105 = vadd.xlane.f32.xlu0 %v2080
          %v2106 = vpop.xlane.xlu0 %2105
          %2107 = vadd.xlane.f32.xlu0 %v2082
          %v2108 = vpop.xlane.xlu0 %2107
          %2109 = vadd.xlane.f32.xlu0 %v2084
          %v2110 = vpop.xlane.xlu0 %2109
          %2111 = vadd.xlane.f32.xlu0 %v2086
          %v2112 = vpop.xlane.xlu0 %2111
          %2113 = vadd.xlane.f32.xlu0 %v2088
          %v2114 = vpop.xlane.xlu0 %2113
          %2115 = vadd.xlane.f32.xlu0 %v2090
          %v2116 = vpop.xlane.xlu0 %2115
          %2117 = vadd.xlane.f32.xlu0 %v2092
          %v2118 = vpop.xlane.xlu0 %2117
          %2119 = vadd.xlane.f32.xlu0 %v2094
          %v2120 = vpop.xlane.xlu0 %2119
          %2121 = vadd.xlane.f32.xlu0 %v2096
          %v2122 = vpop.xlane.xlu0 %2121
          %v2123 = vlog2.pop %v2098
          %v2124 = vmul.f32 %v2123, 0.6931472
          %v2125 = vlog2.pop %v2100
          %v2126 = vmul.f32 %v2125, 0.6931472
          %v2127 = vlog2.pop %v2102
          %v2128 = vmul.f32 %v2127, 0.6931472
          %v2129 = vlog2.pop %v2104
          %v2130 = vmul.f32 %v2129, 0.6931472
          %v2131 = vlog2.pop %v2106
          %v2132 = vmul.f32 %v2131, 0.6931472
          %v2133 = vlog2.pop %v2108
          %v2134 = vmul.f32 %v2133, 0.6931472
          %v2135 = vlog2.pop %v2110
          %v2136 = vmul.f32 %v2135, 0.6931472
          %v2137 = vlog2.pop %v2112
          %v2138 = vmul.f32 %v2137, 0.6931472
          %v2139 = vlog2.pop %v2114
          %v2140 = vmul.f32 %v2139, 0.6931472
          %v2141 = vlog2.pop %v2116
          %v2142 = vmul.f32 %v2141, 0.6931472
          %v2143 = vlog2.pop %v2118
          %v2144 = vmul.f32 %v2143, 0.6931472
          %v2145 = vlog2.pop %v2120
          %v2146 = vmul.f32 %v2145, 0.6931472
          %v2147 = vlog2.pop %v2122
          %v2148 = vmul.f32 %v2147, 0.6931472
          %v2149 = vadd.f32 %v2033, %v2124
          %v2150 = vadd.f32 %v2035, %v2126
          %v2151 = vadd.f32 %v2037, %v2128
          %v2152 = vadd.f32 %v2039, %v2130
          %v2153 = vadd.f32 %v2041, %v2132
          %v2154 = vadd.f32 %v2043, %v2134
          %v2155 = vadd.f32 %v2045, %v2136
          %v2156 = vadd.f32 %v2047, %v2138
          %v2157 = vadd.f32 %v2049, %v2140
          %v2158 = vadd.f32 %v2051, %v2142
          %v2159 = vadd.f32 %v2053, %v2144
          %v2160 = vadd.f32 %v2055, %v2146
          %v2161 = vadd.f32 %v2057, %v2148
          %v2162 = vsub.f32 %v2019, %v2149
          %v2163 = vsub.f32 %v2020, %v2150
          %v2164 = vsub.f32 %v2021, %v2151
          %v2165 = vsub.f32 %v2022, %v2152
          %v2166 = vsub.f32 %v2023, %v2153
          %v2167 = vsub.f32 %v2024, %v2154
          %v2168 = vsub.f32 %v2025, %v2155
          %v2169 = vsub.f32 %v2026, %v2156
          %v2170 = vsub.f32 %v2027, %v2157
          %v2171 = vsub.f32 %v2028, %v2158
          %v2172 = vsub.f32 %v2029, %v2159
          %v2173 = vsub.f32 %v2030, %v2160
          %v2174 = vsub.f32 %v2031, %v2161
          %2175 = vst [vmem:[#allocation12] sm:$0xff] %v2162
          %2176 = vst [vmem:[#allocation12 + $0x8] sm:$0xff] %v2163
          %2177 = vst [vmem:[#allocation12 + $0x10] sm:$0xff] %v2164
          %2178 = vst [vmem:[#allocation12 + $0x18] sm:$0xff] %v2165
          %2179 = vst [vmem:[#allocation12 + $0x20] sm:$0xff] %v2166
          %2180 = vst [vmem:[#allocation12 + $0x28] sm:$0xff] %v2167
          %2181 = vst [vmem:[#allocation12 + $0x30] sm:$0xff] %v2168
          %2182 = vst [vmem:[#allocation12 + $0x38] sm:$0xff] %v2169
          %2183 = vst [vmem:[#allocation12 + $0x40] sm:$0xff] %v2170
          %2184 = vst [vmem:[#allocation12 + $0x48] sm:$0xff] %v2171
          %2185 = vst [vmem:[#allocation12 + $0x50] sm:$0xff] %v2172
          %2186 = vst [vmem:[#allocation12 + $0x58] sm:$0xff] %v2173
          %2187 = vst [vmem:[#allocation12 + $0x60] sm:$0xff] %v2174
        $region64: #{fused_forward.1} parent=39 // pred_fallthru
          _
        // Predicated region
        $region65: #{fused_forward.1} parent=39 // pred_check
          %p2188 = pneg %p155
        $region66: #{fused_forward.1} parent=39 // pred_check_branch
          %2190 = sbr.rel (%p2188) target = $region68
        $region67: #{fused_forward.1} parent=39 // pred_region
          %2192 = vsyncadd [#allocation5], 0
          %s2194 = sshll.u32 [#allocation11], 4
          %s2195 = int_to_ptr.vmem [resolvable:$true] %s2194
          %s2196 = sshll.u32 %s5, 4
          %s2197 = int_to_ptr.hbm [resolvable:$true] %s2196
          %2199 = dma.vmem_to_hbm [thread:$0]  %s2195, 128, %s2197, [#allocation5]
        $region68: #{fused_forward.1} parent=39 // pred_fallthru
          _
        // Predicated region
        $region69: #{fused_forward.1} parent=39 // pred_check
          %p2200 = pneg %p176
        $region70: #{fused_forward.1} parent=39 // pred_check_branch
          %2202 = sbr.rel (%p2200) target = $region72
        $region71: #{fused_forward.1} parent=39 // pred_region
          %2204 = vsyncadd [#allocation13], 0
          %s2205 = sshll.u32 [#allocation12], 4
          %s2206 = int_to_ptr.vmem [resolvable:$true] %s2205
          %s2207 = sshll.u32 %s6, 4
          %s2208 = int_to_ptr.hbm [resolvable:$true] %s2207
          %2213 = dma.vmem_to_hbm [thread:$0]  %s2206, 1664, %s2208, [#allocation13], 128, 128, 8
        $region72: #{fused_forward.1} parent=39 // pred_fallthru
          _
        // Predicated region
        $region73: #{fused_forward.1} parent=39 // pred_check
          %p2214 = pneg %p155
        $region74: #{fused_forward.1} parent=39 // pred_check_branch
          %2216 = sbr.rel (%p2214) target = $region76
        $region75: #{fused_forward.1} parent=39 // pred_region
          %2218 = dma.done [#allocation5], 128
        $region76: #{fused_forward.1} parent=39 // pred_fallthru
          _
        // Predicated region
        $region77: #{fused_forward.1} parent=39 // pred_check
          %p2219 = pneg %p176
        $region78: #{fused_forward.1} parent=39 // pred_check_branch
          %2221 = sbr.rel (%p2219) target = $region80
        $region79: #{fused_forward.1} parent=39 // pred_region
          %2223 = dma.done [#allocation13], 1664
        $region80: #{fused_forward.1} parent=39 // pred_fallthru
          _
      $region40: #{fused_forward.1} parent=5 // pred_fallthru
        _
      %p2224 = scmp.le.s32.totalorder 2, %s22
      // Predicated region
      $region81: #{fused_forward.1} parent=5 // pred_check
        %p2225 = pneg %p2224
      $region82: #{fused_forward.1} parent=5 // pred_check_branch
        %2227 = sbr.rel (%p2225) target = $region84
      $region83: #{fused_forward.1} parent=5 // pred_region
        %s2228 = ssub.s32 %s22, 2
      $region84: #{fused_forward.1} parent=5 // pred_fallthru
        _
    $region6: #{fused_forward.1} parent=1 // loop_footer
      %s26 = sadd.s32 1, %s22
    $region7: #{fused_forward.1} parent=1 // loop_footer_branch
      %21 = sbr.rel target = $region3
    $region8: #{fused_forward.1} parent=1 // loop_exit
      _
    %2229 = vsyncpa [#allocation4], 1
    %s2230 = scalar_lea.sflag [#allocation4], 1
    %2231 = vsyncpa %s2230, 1
    %2232 = vsyncpa [#allocation7], 1
    %s2233 = scalar_lea.sflag [#allocation7], 1
    %2234 = vsyncpa %s2233, 1
    %2235 = vsyncpa [#allocation10], 1
    %2236 = vsyncpa [#allocation5], 1
    %s2237 = scalar_lea.sflag [#allocation5], 1
    %2238 = vsyncpa %s2237, 1
    %2239 = vsyncpa [#allocation13], 1

</llo_original>
